<compile_context>
chip_gen: v5e
topology: v5e:2x2
jax: 0.10.0
libtpu: 0.0.40
codegen_flags: <defaults>
</compile_context>

<pallas_src>
import functools
from types import SimpleNamespace

import numpy as np
import jax
import jax.numpy as jnp
from jax.experimental import pallas as pl
from jax.experimental.pallas import tpu as pltpu

_LANE = 128


def _round_up(x, m):
    return ((x + m - 1) // m) * m


# ----------------------------------------------------------------------------
# In-kernel helpers (traced inside the fused kernel)
# ----------------------------------------------------------------------------
def _gn_relu_rows(y, gamma, beta, num_groups, eps):
    """GroupNorm(affine) + ReLU on channel-major flattened activations.

    y: (TB, D) f32, D = C*H*W channel-major, so each group is a contiguous lane segment of
    width D // num_groups.  gamma/beta: (1, D) f32 (per-channel affine pre-broadcast).
    Two-pass, clamped (biased) variance like PyTorch; no full-width mask accumulation.
    """
    _, d = y.shape
    seg = d // num_groups
    inv = 1.0 / float(seg)
    parts = []
    for g in range(num_groups):                      # static unroll (num_groups == 4)
        blk = y[:, g * seg:(g + 1) * seg]            # (TB, seg), static lane slice
        m = jnp.sum(blk, axis=1, keepdims=True) * inv
        c = blk - m
        var = jnp.maximum(jnp.sum(c * c, axis=1, keepdims=True) * inv, 0.0)
        parts.append(c * jax.lax.rsqrt(var + eps))
    yn = jnp.concatenate(parts, axis=1)
    return jnp.maximum(yn * gamma + beta, 0.0)


def _epc_fused_kernel(x_ref, k1_ref, g1_ref, b1_ref, k2_ref, g2_ref, b2_ref,
                      fcw_ref, fcb_ref, pw_ref, pb_ref, o_ref, *, num_groups, eps):
    # conv1 as dense unrolled-conv operator: bf16 MXU operands, f32 accumulation.
    y1 = jnp.dot(x_ref[...], k1_ref[...], preferred_element_type=jnp.float32)  # (TB, D1)
    y1 = _gn_relu_rows(y1, g1_ref[...], b1_ref[...], num_groups, eps)

    # conv2
    y2 = jnp.dot(y1.astype(jnp.bfloat16), k2_ref[...],
                 preferred_element_type=jnp.float32)                           # (TB, D2)
    y2 = _gn_relu_rows(y2, g2_ref[...], b2_ref[...], num_groups, eps)

    # visual_fc: Flatten (channel-major flat == nn.Flatten on NCHW) -> Linear -> ReLU
    h = jnp.dot(y2.astype(jnp.bfloat16), fcw_ref[...],
                preferred_element_type=jnp.float32)                            # (TB, hid_pad)
    h = jnp.maximum(h + fcb_ref[...], 0.0)

    # projector Linear (columns padded to 128 lanes; wrapper slices back to pdim)
    z = jnp.dot(h.astype(jnp.bfloat16), pw_ref[...],
                preferred_element_type=jnp.float32)                            # (TB, out_pad)
    o_ref[...] = (z + pb_ref[...]).astype(o_ref.dtype)


# ----------------------------------------------------------------------------
# Host-side (init-time) construction of the dense unrolled-conv operators
# ----------------------------------------------------------------------------
def _unrolled_conv_matrix(w, H, W, stride, pad):
    """Dense K with  x.reshape(-1) @ K == conv2d(x, w, stride, pad).reshape(-1).

    Both flattens are channel-major (PyTorch NCHW .reshape).  w: (Cout, Cin, kh, kw) np f32.
    Exact; only sensible for small spatial sizes (built once at init).
    """
    Cout, Cin, KH, KW = w.shape
    OH = (H + 2 * pad - KH) // stride + 1
    OW = (W + 2 * pad - KW) // stride + 1
    K = np.zeros((Cin * H * W, Cout * OH * OW), np.float32)
    for co in range(Cout):
        for oh in range(OH):
            for ow in range(OW):
                fo = co * OH * OW + oh * OW + ow
                for ci in range(Cin):
                    for ki in range(KH):
                        hi = oh * stride + ki - pad
                        if hi < 0 or hi >= H:
                            continue
                        for kj in range(KW):
                            wi = ow * stride + kj - pad
                            if wi < 0 or wi >= W:
                                continue
                            K[ci * H * W + hi * W + wi, fo] = w[co, ci, ki, kj]
    return K, OH, OW


# ----------------------------------------------------------------------------
# EPCEncoder (parameters built deterministically in-script)
# ----------------------------------------------------------------------------
class EPCEncoderPallas:
    def __init__(self, cfg, key):
        self.cfg = cfg
        cin, H, W = cfg.ENCODER.input_shape
        bp = cfg.ENCODER.baseplanes
        self.ngroups = bp // 2
        hidden = cfg.ENCODER.hidden_size
        pdim = cfg.PROJECTOR.dim

        ks = jax.random.split(key, 6)
        # Raw PyTorch-layout parameters.
        conv1_w = 0.1 * jax.random.normal(ks[0], (bp, cin, 3, 3), jnp.float32)
        conv2_w = 0.1 * jax.random.normal(ks[1], (2 * bp, bp, 3, 3), jnp.float32)
        gn1_g = jnp.ones((bp,), jnp.float32)
        gn1_b = jnp.zeros((bp,), jnp.float32)
        gn2_g = jnp.ones((2 * bp,), jnp.float32)
        gn2_b = jnp.zeros((2 * bp,), jnp.float32)

        k1, OH1, OW1 = _unrolled_conv_matrix(np.asarray(conv1_w), H, W, stride=2, pad=1)
        k2, OH2, OW2 = _unrolled_conv_matrix(np.asarray(conv2_w), OH1, OW1, stride=2, pad=1)
        self.output_shape = (2 * bp, OH2, OW2)
        fc_in = int(np.prod(self.output_shape))

        fc_w = 0.05 * jax.random.normal(ks[2], (hidden, fc_in), jnp.float32)   # (out, in)
        fc_b = 0.05 * jax.random.normal(ks[3], (hidden,), jnp.float32)
        proj_w = 0.05 * jax.random.normal(ks[4], (pdim, hidden), jnp.float32)
        proj_b = 0.05 * jax.random.normal(ks[5], (pdim,), jnp.float32)

        # Kernel-ready parameters, precomputed ONCE: bf16 for MXU operands, f32 for
        # GroupNorm affine / biases.  hidden/pdim zero-padded to 128 for lane-dense
        # matmuls and an unmasked final store.
        sp1, sp2 = OH1 * OW1, OH2 * OW2
        self.din = cin * H * W
        self.d1 = bp * sp1
        self.d2 = 2 * bp * sp2
        self.hid_pad = _round_up(hidden, _LANE)
        self.out_pad = _round_up(pdim, _LANE)
        self.pdim = pdim

        self.k1 = jnp.asarray(k1, jnp.bfloat16)                        # (din, d1)
        self.k2 = jnp.asarray(k2, jnp.bfloat16)                        # (d1, d2)
        self.g1f = jnp.repeat(gn1_g, sp1).reshape(1, self.d1)
        self.b1f = jnp.repeat(gn1_b, sp1).reshape(1, self.d1)
        self.g2f = jnp.repeat(gn2_g, sp2).reshape(1, self.d2)
        self.b2f = jnp.repeat(gn2_b, sp2).reshape(1, self.d2)

        fcwT = np.zeros((fc_in, self.hid_pad), np.float32)
        fcwT[:, :hidden] = np.asarray(fc_w).T
        fcb = np.zeros((1, self.hid_pad), np.float32)
        fcb[0, :hidden] = np.asarray(fc_b)
        pwT = np.zeros((self.hid_pad, self.out_pad), np.float32)
        pwT[:hidden, :pdim] = np.asarray(proj_w).T
        pb = np.zeros((1, self.out_pad), np.float32)
        pb[0, :pdim] = np.asarray(proj_b)

        self.fcwT = jnp.asarray(fcwT, jnp.bfloat16)                    # (fc_in, hid_pad)
        self.fcb = jnp.asarray(fcb, jnp.float32)
        self.pwT = jnp.asarray(pwT, jnp.bfloat16)                      # (hid_pad, out_pad)
        self.pb = jnp.asarray(pb, jnp.float32)

    def __call__(self, x):
        # x: NCHW (Nb, Cin, H, W).  Channel-major flatten is pure layout plumbing.
        nb = x.shape[0]
        x_flat = x.reshape(nb, -1).astype(jnp.bfloat16)   # bf16: halve HBM->VMEM DMA bytes
        tb = 256 if nb >= 256 else max(8, _round_up(nb, 8))
        nb_pad = _round_up(nb, tb)
        if nb_pad != nb:
            x_flat = jnp.pad(x_flat, ((0, nb_pad - nb), (0, 0)))
        grid = (nb_pad // tb,)

        def full_spec(a):
            # Full-shape block, constant block index -> stays VMEM-resident across the grid.
            return pl.BlockSpec(a.shape, lambda i: tuple(0 for _ in a.shape))

        weights = (self.k1, self.g1f, self.b1f, self.k2, self.g2f, self.b2f,
                   self.fcwT, self.fcb, self.pwT, self.pb)
        in_specs = [pl.BlockSpec((tb, self.din), lambda i: (i, 0))]
        in_specs += [full_spec(w) for w in weights]
        out_specs = pl.BlockSpec((tb, self.out_pad), lambda i: (i, 0))

        flops = 2 * nb_pad * (self.din * self.d1 + self.d1 * self.d2 +
                              self.d2 * self.hid_pad + self.hid_pad * self.out_pad)
        bytes_accessed = (int(x_flat.size) * 2 + nb_pad * self.out_pad * 4 +
                          sum(int(np.prod(w.shape)) * w.dtype.itemsize for w in weights))

        out = pl.pallas_call(
            functools.partial(_epc_fused_kernel, num_groups=self.ngroups, eps=1e-5),
            out_shape=jax.ShapeDtypeStruct((nb_pad, self.out_pad), jnp.float32),
            grid=grid,
            in_specs=in_specs,
            out_specs=out_specs,
            compiler_params=pltpu.CompilerParams(
                dimension_semantics=("parallel",),
                vmem_limit_bytes=64 * 1024 * 1024,
            ),
            cost_estimate=pl.CostEstimate(
                flops=flops,
                transcendentals=nb_pad * 2 * self.ngroups,
                bytes_accessed=bytes_accessed,
            ),
        )(x_flat, *weights)
        return out[:nb, :self.pdim]


def make_cfg():
    return SimpleNamespace(
        ENCODER=SimpleNamespace(
            input_shape=(4, 16, 16),
            baseplanes=8,
            backbone="simple_resnet",
            normalize_visual_inputs=False,
            hidden_size=32,
        ),
        PROJECTOR=SimpleNamespace(dim=16),
    )


if __name__ == "__main__":
    cfg = make_cfg()
    key = jax.random.PRNGKey(0)
    pkey, xkey = jax.random.split(key)

    model = EPCEncoderPallas(cfg, pkey)
    x = jax.random.normal(xkey, (2, 4, 16, 16), jnp.float32)  # NCHW

    out = jax.block_until_ready(model(x))
    assert out.shape == (2, cfg.PROJECTOR.dim), out.shape
    assert jnp.all(jnp.isfinite(out))
    print("KERNEL_OK")
</pallas_src>

<mosaic_0001>
module attributes {stable_mosaic.version = 11 : i64} {
  func.func @_epc_fused_kernel(%arg0: i32, %arg1: memref<8x1024xbf16, #tpu.memory_space<vmem>>, %arg2: memref<1024x512xbf16, #tpu.memory_space<vmem>>, %arg3: memref<1x512xf32, #tpu.memory_space<vmem>>, %arg4: memref<1x512xf32, #tpu.memory_space<vmem>>, %arg5: memref<512x256xbf16, #tpu.memory_space<vmem>>, %arg6: memref<1x256xf32, #tpu.memory_space<vmem>>, %arg7: memref<1x256xf32, #tpu.memory_space<vmem>>, %arg8: memref<256x128xbf16, #tpu.memory_space<vmem>>, %arg9: memref<1x128xf32, #tpu.memory_space<vmem>>, %arg10: memref<128x128xbf16, #tpu.memory_space<vmem>>, %arg11: memref<1x128xf32, #tpu.memory_space<vmem>>, %arg12: memref<8x128xf32, #tpu.memory_space<vmem>>) attributes {dimension_semantics = [#tpu.dimension_semantics<parallel>], iteration_bounds = array<i64: 1>, scalar_prefetch = 0 : i64, scratch_operands = 0 : i64, tpu.core_type = #tpu.core_type<tc>, window_params = [{transform_indices = @transform_0, window_bounds = array<i64: 8, 1024>}, {pipeline_mode = #tpu.pipeline_mode<synchronous>, transform_indices = @transform_1, window_bounds = array<i64: 1024, 512>}, {pipeline_mode = #tpu.pipeline_mode<synchronous>, transform_indices = @transform_2, window_bounds = array<i64: 1, 512>}, {pipeline_mode = #tpu.pipeline_mode<synchronous>, transform_indices = @transform_3, window_bounds = array<i64: 1, 512>}, {pipeline_mode = #tpu.pipeline_mode<synchronous>, transform_indices = @transform_4, window_bounds = array<i64: 512, 256>}, {pipeline_mode = #tpu.pipeline_mode<synchronous>, transform_indices = @transform_5, window_bounds = array<i64: 1, 256>}, {pipeline_mode = #tpu.pipeline_mode<synchronous>, transform_indices = @transform_6, window_bounds = array<i64: 1, 256>}, {pipeline_mode = #tpu.pipeline_mode<synchronous>, transform_indices = @transform_7, window_bounds = array<i64: 256, 128>}, {pipeline_mode = #tpu.pipeline_mode<synchronous>, transform_indices = @transform_8, window_bounds = array<i64: 1, 128>}, {pipeline_mode = #tpu.pipeline_mode<synchronous>, transform_indices = @transform_9, window_bounds = array<i64: 128, 128>}, {pipeline_mode = #tpu.pipeline_mode<synchronous>, transform_indices = @transform_10, window_bounds = array<i64: 1, 128>}, {transform_indices = @transform_11, window_bounds = array<i64: 8, 128>}]} {
    %c0 = arith.constant 0 : index
    %c0_0 = arith.constant 0 : index
    %0 = vector.load %arg1[%c0, %c0_0] : memref<8x1024xbf16, #tpu.memory_space<vmem>>, vector<8x1024xbf16>
    %c0_1 = arith.constant 0 : index
    %c0_2 = arith.constant 0 : index
    %1 = vector.load %arg2[%c0_1, %c0_2] : memref<1024x512xbf16, #tpu.memory_space<vmem>>, vector<1024x512xbf16>
    %cst = arith.constant dense<0.000000e+00> : vector<8x512xf32>
    %2 = tpu.matmul %0, %1, %cst {dimension_numbers = #tpu.dot_dimension_numbers<[1], [0], [0], [1], [0, 0, 1, 1], [], []>} : vector<8x1024xbf16>, vector<1024x512xbf16>, vector<8x512xf32> -> vector<8x512xf32>
    %c0_3 = arith.constant 0 : index
    %c0_4 = arith.constant 0 : index
    %3 = vector.load %arg3[%c0_3, %c0_4] : memref<1x512xf32, #tpu.memory_space<vmem>>, vector<1x512xf32>
    %c0_5 = arith.constant 0 : index
    %c0_6 = arith.constant 0 : index
    %4 = vector.load %arg4[%c0_5, %c0_6] : memref<1x512xf32, #tpu.memory_space<vmem>>, vector<1x512xf32>
    %5 = vector.extract_strided_slice %2 {offsets = [0, 0], sizes = [8, 128], strides = [1, 1]} : vector<8x512xf32> to vector<8x128xf32>
    %cst_7 = arith.constant dense<0.000000e+00> : vector<8xf32>
    %6 = vector.multi_reduction <add>, %5, %cst_7 [1] : vector<8x128xf32> to vector<8xf32>
    %7 = vector.shape_cast %6 : vector<8xf32> to vector<8x1xf32>
    %cst_8 = arith.constant 7.812500e-03 : f32
    %8 = vector.broadcast %cst_8 : f32 to vector<8x1xf32>
    %9 = arith.mulf %7, %8 : vector<8x1xf32>
    %10 = vector.broadcast %9 : vector<8x1xf32> to vector<8x128xf32>
    %11 = arith.subf %5, %10 : vector<8x128xf32>
    %12 = arith.mulf %11, %11 : vector<8x128xf32>
    %cst_9 = arith.constant dense<0.000000e+00> : vector<8xf32>
    %13 = vector.multi_reduction <add>, %12, %cst_9 [1] : vector<8x128xf32> to vector<8xf32>
    %14 = vector.shape_cast %13 : vector<8xf32> to vector<8x1xf32>
    %cst_10 = arith.constant 7.812500e-03 : f32
    %15 = vector.broadcast %cst_10 : f32 to vector<8x1xf32>
    %16 = arith.mulf %14, %15 : vector<8x1xf32>
    %cst_11 = arith.constant 0.000000e+00 : f32
    %17 = vector.broadcast %cst_11 : f32 to vector<8x1xf32>
    %18 = arith.maximumf %16, %17 : vector<8x1xf32>
    %cst_12 = arith.constant 9.99999974E-6 : f32
    %19 = vector.broadcast %cst_12 : f32 to vector<8x1xf32>
    %20 = arith.addf %18, %19 : vector<8x1xf32>
    %21 = math.rsqrt %20 : vector<8x1xf32>
    %22 = vector.broadcast %21 : vector<8x1xf32> to vector<8x128xf32>
    %23 = arith.mulf %11, %22 : vector<8x128xf32>
    %24 = vector.extract_strided_slice %2 {offsets = [0, 128], sizes = [8, 128], strides = [1, 1]} : vector<8x512xf32> to vector<8x128xf32>
    %cst_13 = arith.constant dense<0.000000e+00> : vector<8xf32>
    %25 = vector.multi_reduction <add>, %24, %cst_13 [1] : vector<8x128xf32> to vector<8xf32>
    %26 = vector.shape_cast %25 : vector<8xf32> to vector<8x1xf32>
    %cst_14 = arith.constant 7.812500e-03 : f32
    %27 = vector.broadcast %cst_14 : f32 to vector<8x1xf32>
    %28 = arith.mulf %26, %27 : vector<8x1xf32>
    %29 = vector.broadcast %28 : vector<8x1xf32> to vector<8x128xf32>
    %30 = arith.subf %24, %29 : vector<8x128xf32>
    %31 = arith.mulf %30, %30 : vector<8x128xf32>
    %cst_15 = arith.constant dense<0.000000e+00> : vector<8xf32>
    %32 = vector.multi_reduction <add>, %31, %cst_15 [1] : vector<8x128xf32> to vector<8xf32>
    %33 = vector.shape_cast %32 : vector<8xf32> to vector<8x1xf32>
    %cst_16 = arith.constant 7.812500e-03 : f32
    %34 = vector.broadcast %cst_16 : f32 to vector<8x1xf32>
    %35 = arith.mulf %33, %34 : vector<8x1xf32>
    %cst_17 = arith.constant 0.000000e+00 : f32
    %36 = vector.broadcast %cst_17 : f32 to vector<8x1xf32>
    %37 = arith.maximumf %35, %36 : vector<8x1xf32>
    %cst_18 = arith.constant 9.99999974E-6 : f32
    %38 = vector.broadcast %cst_18 : f32 to vector<8x1xf32>
    %39 = arith.addf %37, %38 : vector<8x1xf32>
    %40 = math.rsqrt %39 : vector<8x1xf32>
    %41 = vector.broadcast %40 : vector<8x1xf32> to vector<8x128xf32>
    %42 = arith.mulf %30, %41 : vector<8x128xf32>
    %43 = vector.extract_strided_slice %2 {offsets = [0, 256], sizes = [8, 128], strides = [1, 1]} : vector<8x512xf32> to vector<8x128xf32>
    %cst_19 = arith.constant dense<0.000000e+00> : vector<8xf32>
    %44 = vector.multi_reduction <add>, %43, %cst_19 [1] : vector<8x128xf32> to vector<8xf32>
    %45 = vector.shape_cast %44 : vector<8xf32> to vector<8x1xf32>
    %cst_20 = arith.constant 7.812500e-03 : f32
    %46 = vector.broadcast %cst_20 : f32 to vector<8x1xf32>
    %47 = arith.mulf %45, %46 : vector<8x1xf32>
    %48 = vector.broadcast %47 : vector<8x1xf32> to vector<8x128xf32>
    %49 = arith.subf %43, %48 : vector<8x128xf32>
    %50 = arith.mulf %49, %49 : vector<8x128xf32>
    %cst_21 = arith.constant dense<0.000000e+00> : vector<8xf32>
    %51 = vector.multi_reduction <add>, %50, %cst_21 [1] : vector<8x128xf32> to vector<8xf32>
    %52 = vector.shape_cast %51 : vector<8xf32> to vector<8x1xf32>
    %cst_22 = arith.constant 7.812500e-03 : f32
    %53 = vector.broadcast %cst_22 : f32 to vector<8x1xf32>
    %54 = arith.mulf %52, %53 : vector<8x1xf32>
    %cst_23 = arith.constant 0.000000e+00 : f32
    %55 = vector.broadcast %cst_23 : f32 to vector<8x1xf32>
    %56 = arith.maximumf %54, %55 : vector<8x1xf32>
    %cst_24 = arith.constant 9.99999974E-6 : f32
    %57 = vector.broadcast %cst_24 : f32 to vector<8x1xf32>
    %58 = arith.addf %56, %57 : vector<8x1xf32>
    %59 = math.rsqrt %58 : vector<8x1xf32>
    %60 = vector.broadcast %59 : vector<8x1xf32> to vector<8x128xf32>
    %61 = arith.mulf %49, %60 : vector<8x128xf32>
    %62 = vector.extract_strided_slice %2 {offsets = [0, 384], sizes = [8, 128], strides = [1, 1]} : vector<8x512xf32> to vector<8x128xf32>
    %cst_25 = arith.constant dense<0.000000e+00> : vector<8xf32>
    %63 = vector.multi_reduction <add>, %62, %cst_25 [1] : vector<8x128xf32> to vector<8xf32>
    %64 = vector.shape_cast %63 : vector<8xf32> to vector<8x1xf32>
    %cst_26 = arith.constant 7.812500e-03 : f32
    %65 = vector.broadcast %cst_26 : f32 to vector<8x1xf32>
    %66 = arith.mulf %64, %65 : vector<8x1xf32>
    %67 = vector.broadcast %66 : vector<8x1xf32> to vector<8x128xf32>
    %68 = arith.subf %62, %67 : vector<8x128xf32>
    %69 = arith.mulf %68, %68 : vector<8x128xf32>
    %cst_27 = arith.constant dense<0.000000e+00> : vector<8xf32>
    %70 = vector.multi_reduction <add>, %69, %cst_27 [1] : vector<8x128xf32> to vector<8xf32>
    %71 = vector.shape_cast %70 : vector<8xf32> to vector<8x1xf32>
    %cst_28 = arith.constant 7.812500e-03 : f32
    %72 = vector.broadcast %cst_28 : f32 to vector<8x1xf32>
    %73 = arith.mulf %71, %72 : vector<8x1xf32>
    %cst_29 = arith.constant 0.000000e+00 : f32
    %74 = vector.broadcast %cst_29 : f32 to vector<8x1xf32>
    %75 = arith.maximumf %73, %74 : vector<8x1xf32>
    %cst_30 = arith.constant 9.99999974E-6 : f32
    %76 = vector.broadcast %cst_30 : f32 to vector<8x1xf32>
    %77 = arith.addf %75, %76 : vector<8x1xf32>
    %78 = math.rsqrt %77 : vector<8x1xf32>
    %79 = vector.broadcast %78 : vector<8x1xf32> to vector<8x128xf32>
    %80 = arith.mulf %68, %79 : vector<8x128xf32>
    %81 = tpu.concatenate %23, %42, %61, %80 in 1 : vector<8x128xf32>, vector<8x128xf32>, vector<8x128xf32>, vector<8x128xf32> -> vector<8x512xf32>
    %82 = vector.broadcast %3 : vector<1x512xf32> to vector<8x512xf32>
    %83 = arith.mulf %81, %82 : vector<8x512xf32>
    %84 = vector.broadcast %4 : vector<1x512xf32> to vector<8x512xf32>
    %85 = arith.addf %83, %84 : vector<8x512xf32>
    %cst_31 = arith.constant 0.000000e+00 : f32
    %86 = vector.broadcast %cst_31 : f32 to vector<8x512xf32>
    %87 = arith.maximumf %85, %86 : vector<8x512xf32>
    %88 = arith.truncf %87 : vector<8x512xf32> to vector<8x512xbf16>
    %c0_32 = arith.constant 0 : index
    %c0_33 = arith.constant 0 : index
    %89 = vector.load %arg5[%c0_32, %c0_33] : memref<512x256xbf16, #tpu.memory_space<vmem>>, vector<512x256xbf16>
    %cst_34 = arith.constant dense<0.000000e+00> : vector<8x256xf32>
    %90 = tpu.matmul %88, %89, %cst_34 {dimension_numbers = #tpu.dot_dimension_numbers<[1], [0], [0], [1], [0, 0, 1, 1], [], []>} : vector<8x512xbf16>, vector<512x256xbf16>, vector<8x256xf32> -> vector<8x256xf32>
    %c0_35 = arith.constant 0 : index
    %c0_36 = arith.constant 0 : index
    %91 = vector.load %arg6[%c0_35, %c0_36] : memref<1x256xf32, #tpu.memory_space<vmem>>, vector<1x256xf32>
    %c0_37 = arith.constant 0 : index
    %c0_38 = arith.constant 0 : index
    %92 = vector.load %arg7[%c0_37, %c0_38] : memref<1x256xf32, #tpu.memory_space<vmem>>, vector<1x256xf32>
    %93 = vector.extract_strided_slice %90 {offsets = [0, 0], sizes = [8, 64], strides = [1, 1]} : vector<8x256xf32> to vector<8x64xf32>
    %cst_39 = arith.constant dense<0.000000e+00> : vector<8xf32>
    %94 = vector.multi_reduction <add>, %93, %cst_39 [1] : vector<8x64xf32> to vector<8xf32>
    %95 = vector.shape_cast %94 : vector<8xf32> to vector<8x1xf32>
    %cst_40 = arith.constant 1.562500e-02 : f32
    %96 = vector.broadcast %cst_40 : f32 to vector<8x1xf32>
    %97 = arith.mulf %95, %96 : vector<8x1xf32>
    %98 = vector.broadcast %97 : vector<8x1xf32> to vector<8x64xf32>
    %99 = arith.subf %93, %98 : vector<8x64xf32>
    %100 = arith.mulf %99, %99 : vector<8x64xf32>
    %cst_41 = arith.constant dense<0.000000e+00> : vector<8xf32>
    %101 = vector.multi_reduction <add>, %100, %cst_41 [1] : vector<8x64xf32> to vector<8xf32>
    %102 = vector.shape_cast %101 : vector<8xf32> to vector<8x1xf32>
    %cst_42 = arith.constant 1.562500e-02 : f32
    %103 = vector.broadcast %cst_42 : f32 to vector<8x1xf32>
    %104 = arith.mulf %102, %103 : vector<8x1xf32>
    %cst_43 = arith.constant 0.000000e+00 : f32
    %105 = vector.broadcast %cst_43 : f32 to vector<8x1xf32>
    %106 = arith.maximumf %104, %105 : vector<8x1xf32>
    %cst_44 = arith.constant 9.99999974E-6 : f32
    %107 = vector.broadcast %cst_44 : f32 to vector<8x1xf32>
    %108 = arith.addf %106, %107 : vector<8x1xf32>
    %109 = math.rsqrt %108 : vector<8x1xf32>
    %110 = vector.broadcast %109 : vector<8x1xf32> to vector<8x64xf32>
    %111 = arith.mulf %99, %110 : vector<8x64xf32>
    %112 = vector.extract_strided_slice %90 {offsets = [0, 64], sizes = [8, 64], strides = [1, 1]} : vector<8x256xf32> to vector<8x64xf32>
    %cst_45 = arith.constant dense<0.000000e+00> : vector<8xf32>
    %113 = vector.multi_reduction <add>, %112, %cst_45 [1] : vector<8x64xf32> to vector<8xf32>
    %114 = vector.shape_cast %113 : vector<8xf32> to vector<8x1xf32>
    %cst_46 = arith.constant 1.562500e-02 : f32
    %115 = vector.broadcast %cst_46 : f32 to vector<8x1xf32>
    %116 = arith.mulf %114, %115 : vector<8x1xf32>
    %117 = vector.broadcast %116 : vector<8x1xf32> to vector<8x64xf32>
    %118 = arith.subf %112, %117 : vector<8x64xf32>
    %119 = arith.mulf %118, %118 : vector<8x64xf32>
    %cst_47 = arith.constant dense<0.000000e+00> : vector<8xf32>
    %120 = vector.multi_reduction <add>, %119, %cst_47 [1] : vector<8x64xf32> to vector<8xf32>
    %121 = vector.shape_cast %120 : vector<8xf32> to vector<8x1xf32>
    %cst_48 = arith.constant 1.562500e-02 : f32
    %122 = vector.broadcast %cst_48 : f32 to vector<8x1xf32>
    %123 = arith.mulf %121, %122 : vector<8x1xf32>
    %cst_49 = arith.constant 0.000000e+00 : f32
    %124 = vector.broadcast %cst_49 : f32 to vector<8x1xf32>
    %125 = arith.maximumf %123, %124 : vector<8x1xf32>
    %cst_50 = arith.constant 9.99999974E-6 : f32
    %126 = vector.broadcast %cst_50 : f32 to vector<8x1xf32>
    %127 = arith.addf %125, %126 : vector<8x1xf32>
    %128 = math.rsqrt %127 : vector<8x1xf32>
    %129 = vector.broadcast %128 : vector<8x1xf32> to vector<8x64xf32>
    %130 = arith.mulf %118, %129 : vector<8x64xf32>
    %131 = vector.extract_strided_slice %90 {offsets = [0, 128], sizes = [8, 64], strides = [1, 1]} : vector<8x256xf32> to vector<8x64xf32>
    %cst_51 = arith.constant dense<0.000000e+00> : vector<8xf32>
    %132 = vector.multi_reduction <add>, %131, %cst_51 [1] : vector<8x64xf32> to vector<8xf32>
    %133 = vector.shape_cast %132 : vector<8xf32> to vector<8x1xf32>
    %cst_52 = arith.constant 1.562500e-02 : f32
    %134 = vector.broadcast %cst_52 : f32 to vector<8x1xf32>
    %135 = arith.mulf %133, %134 : vector<8x1xf32>
    %136 = vector.broadcast %135 : vector<8x1xf32> to vector<8x64xf32>
    %137 = arith.subf %131, %136 : vector<8x64xf32>
    %138 = arith.mulf %137, %137 : vector<8x64xf32>
    %cst_53 = arith.constant dense<0.000000e+00> : vector<8xf32>
    %139 = vector.multi_reduction <add>, %138, %cst_53 [1] : vector<8x64xf32> to vector<8xf32>
    %140 = vector.shape_cast %139 : vector<8xf32> to vector<8x1xf32>
    %cst_54 = arith.constant 1.562500e-02 : f32
    %141 = vector.broadcast %cst_54 : f32 to vector<8x1xf32>
    %142 = arith.mulf %140, %141 : vector<8x1xf32>
    %cst_55 = arith.constant 0.000000e+00 : f32
    %143 = vector.broadcast %cst_55 : f32 to vector<8x1xf32>
    %144 = arith.maximumf %142, %143 : vector<8x1xf32>
    %cst_56 = arith.constant 9.99999974E-6 : f32
    %145 = vector.broadcast %cst_56 : f32 to vector<8x1xf32>
    %146 = arith.addf %144, %145 : vector<8x1xf32>
    %147 = math.rsqrt %146 : vector<8x1xf32>
    %148 = vector.broadcast %147 : vector<8x1xf32> to vector<8x64xf32>
    %149 = arith.mulf %137, %148 : vector<8x64xf32>
    %150 = vector.extract_strided_slice %90 {offsets = [0, 192], sizes = [8, 64], strides = [1, 1]} : vector<8x256xf32> to vector<8x64xf32>
    %cst_57 = arith.constant dense<0.000000e+00> : vector<8xf32>
    %151 = vector.multi_reduction <add>, %150, %cst_57 [1] : vector<8x64xf32> to vector<8xf32>
    %152 = vector.shape_cast %151 : vector<8xf32> to vector<8x1xf32>
    %cst_58 = arith.constant 1.562500e-02 : f32
    %153 = vector.broadcast %cst_58 : f32 to vector<8x1xf32>
    %154 = arith.mulf %152, %153 : vector<8x1xf32>
    %155 = vector.broadcast %154 : vector<8x1xf32> to vector<8x64xf32>
    %156 = arith.subf %150, %155 : vector<8x64xf32>
    %157 = arith.mulf %156, %156 : vector<8x64xf32>
    %cst_59 = arith.constant dense<0.000000e+00> : vector<8xf32>
    %158 = vector.multi_reduction <add>, %157, %cst_59 [1] : vector<8x64xf32> to vector<8xf32>
    %159 = vector.shape_cast %158 : vector<8xf32> to vector<8x1xf32>
    %cst_60 = arith.constant 1.562500e-02 : f32
    %160 = vector.broadcast %cst_60 : f32 to vector<8x1xf32>
    %161 = arith.mulf %159, %160 : vector<8x1xf32>
    %cst_61 = arith.constant 0.000000e+00 : f32
    %162 = vector.broadcast %cst_61 : f32 to vector<8x1xf32>
    %163 = arith.maximumf %161, %162 : vector<8x1xf32>
    %cst_62 = arith.constant 9.99999974E-6 : f32
    %164 = vector.broadcast %cst_62 : f32 to vector<8x1xf32>
    %165 = arith.addf %163, %164 : vector<8x1xf32>
    %166 = math.rsqrt %165 : vector<8x1xf32>
    %167 = vector.broadcast %166 : vector<8x1xf32> to vector<8x64xf32>
    %168 = arith.mulf %156, %167 : vector<8x64xf32>
    %169 = tpu.concatenate %111, %130, %149, %168 in 1 : vector<8x64xf32>, vector<8x64xf32>, vector<8x64xf32>, vector<8x64xf32> -> vector<8x256xf32>
    %170 = vector.broadcast %91 : vector<1x256xf32> to vector<8x256xf32>
    %171 = arith.mulf %169, %170 : vector<8x256xf32>
    %172 = vector.broadcast %92 : vector<1x256xf32> to vector<8x256xf32>
    %173 = arith.addf %171, %172 : vector<8x256xf32>
    %cst_63 = arith.constant 0.000000e+00 : f32
    %174 = vector.broadcast %cst_63 : f32 to vector<8x256xf32>
    %175 = arith.maximumf %173, %174 : vector<8x256xf32>
    %176 = arith.truncf %175 : vector<8x256xf32> to vector<8x256xbf16>
    %c0_64 = arith.constant 0 : index
    %c0_65 = arith.constant 0 : index
    %177 = vector.load %arg8[%c0_64, %c0_65] : memref<256x128xbf16, #tpu.memory_space<vmem>>, vector<256x128xbf16>
    %cst_66 = arith.constant dense<0.000000e+00> : vector<8x128xf32>
    %178 = tpu.matmul %176, %177, %cst_66 {dimension_numbers = #tpu.dot_dimension_numbers<[1], [0], [0], [1], [0, 0, 1, 1], [], []>} : vector<8x256xbf16>, vector<256x128xbf16>, vector<8x128xf32> -> vector<8x128xf32>
    %c0_67 = arith.constant 0 : index
    %c0_68 = arith.constant 0 : index
    %179 = vector.load %arg9[%c0_67, %c0_68] : memref<1x128xf32, #tpu.memory_space<vmem>>, vector<1x128xf32>
    %180 = vector.broadcast %179 : vector<1x128xf32> to vector<8x128xf32>
    %181 = arith.addf %178, %180 : vector<8x128xf32>
    %cst_69 = arith.constant 0.000000e+00 : f32
    %182 = vector.broadcast %cst_69 : f32 to vector<8x128xf32>
    %183 = arith.maximumf %181, %182 : vector<8x128xf32>
    %184 = arith.truncf %183 : vector<8x128xf32> to vector<8x128xbf16>
    %c0_70 = arith.constant 0 : index
    %c0_71 = arith.constant 0 : index
    %185 = vector.load %arg10[%c0_70, %c0_71] : memref<128x128xbf16, #tpu.memory_space<vmem>>, vector<128x128xbf16>
    %cst_72 = arith.constant dense<0.000000e+00> : vector<8x128xf32>
    %186 = tpu.matmul %184, %185, %cst_72 {dimension_numbers = #tpu.dot_dimension_numbers<[1], [0], [0], [1], [0, 0, 1, 1], [], []>} : vector<8x128xbf16>, vector<128x128xbf16>, vector<8x128xf32> -> vector<8x128xf32>
    %c0_73 = arith.constant 0 : index
    %c0_74 = arith.constant 0 : index
    %187 = vector.load %arg11[%c0_73, %c0_74] : memref<1x128xf32, #tpu.memory_space<vmem>>, vector<1x128xf32>
    %188 = vector.broadcast %187 : vector<1x128xf32> to vector<8x128xf32>
    %189 = arith.addf %186, %188 : vector<8x128xf32>
    %c0_75 = arith.constant 0 : index
    %c0_76 = arith.constant 0 : index
    %190 = vector.load %arg12[%c0_75, %c0_76] : memref<8x128xf32, #tpu.memory_space<vmem>>, vector<8x128xf32>
    tpu.vector_store %arg12[%c0_75, %c0_76], %189 {strides = array<i32>} : memref<8x128xf32, #tpu.memory_space<vmem>>, vector<8x128xf32>,
    return
  }
  func.func @transform_0(%arg0: i32) -> (i32, i32) {
    %c0_i32 = arith.constant 0 : i32
    %c0_i32_0 = arith.constant 0 : i32
    return %arg0, %c0_i32 : i32, i32
  }
  func.func @transform_1(%arg0: i32) -> (i32, i32) {
    %c0_i32 = arith.constant 0 : i32
    %c0_i32_0 = arith.constant 0 : i32
    %c0_i32_1 = arith.constant 0 : i32
    return %c0_i32, %c0_i32_0 : i32, i32
  }
  func.func @transform_2(%arg0: i32) -> (i32, i32) {
    %c0_i32 = arith.constant 0 : i32
    %c0_i32_0 = arith.constant 0 : i32
    %c0_i32_1 = arith.constant 0 : i32
    return %c0_i32, %c0_i32_0 : i32, i32
  }
  func.func @transform_3(%arg0: i32) -> (i32, i32) {
    %c0_i32 = arith.constant 0 : i32
    %c0_i32_0 = arith.constant 0 : i32
    %c0_i32_1 = arith.constant 0 : i32
    return %c0_i32, %c0_i32_0 : i32, i32
  }
  func.func @transform_4(%arg0: i32) -> (i32, i32) {
    %c0_i32 = arith.constant 0 : i32
    %c0_i32_0 = arith.constant 0 : i32
    %c0_i32_1 = arith.constant 0 : i32
    return %c0_i32, %c0_i32_0 : i32, i32
  }
  func.func @transform_5(%arg0: i32) -> (i32, i32) {
    %c0_i32 = arith.constant 0 : i32
    %c0_i32_0 = arith.constant 0 : i32
    %c0_i32_1 = arith.constant 0 : i32
    return %c0_i32, %c0_i32_0 : i32, i32
  }
  func.func @transform_6(%arg0: i32) -> (i32, i32) {
    %c0_i32 = arith.constant 0 : i32
    %c0_i32_0 = arith.constant 0 : i32
    %c0_i32_1 = arith.constant 0 : i32
    return %c0_i32, %c0_i32_0 : i32, i32
  }
  func.func @transform_7(%arg0: i32) -> (i32, i32) {
    %c0_i32 = arith.constant 0 : i32
    %c0_i32_0 = arith.constant 0 : i32
    %c0_i32_1 = arith.constant 0 : i32
    return %c0_i32, %c0_i32_0 : i32, i32
  }
  func.func @transform_8(%arg0: i32) -> (i32, i32) {
    %c0_i32 = arith.constant 0 : i32
    %c0_i32_0 = arith.constant 0 : i32
    %c0_i32_1 = arith.constant 0 : i32
    return %c0_i32, %c0_i32_0 : i32, i32
  }
  func.func @transform_9(%arg0: i32) -> (i32, i32) {
    %c0_i32 = arith.constant 0 : i32
    %c0_i32_0 = arith.constant 0 : i32
    %c0_i32_1 = arith.constant 0 : i32
    return %c0_i32, %c0_i32_0 : i32, i32
  }
  func.func @transform_10(%arg0: i32) -> (i32, i32) {
    %c0_i32 = arith.constant 0 : i32
    %c0_i32_0 = arith.constant 0 : i32
    %c0_i32_1 = arith.constant 0 : i32
    return %c0_i32, %c0_i32_0 : i32, i32
  }
  func.func @transform_11(%arg0: i32) -> (i32, i32) {
    %c0_i32 = arith.constant 0 : i32
    %c0_i32_0 = arith.constant 0 : i32
    return %arg0, %c0_i32 : i32, i32
  }
}

</mosaic_0001>

<llo_original>
// kernel: tpu_custom_call.1
$region0: #{tpu_custom_call.1}
  #allocation0 [shape = 'u32[]', space=smem, size = 0x4, offset = 0x4, fixed_abs, tag = 'smem constant byte address 0x4 - core index']
  #allocation1 [shape = 'u32[72,128]{1,0:T(1,128)}', space=vmem, size = 0x9000, scoped, tag = 'internal scratch']
  %s0 = inlined_call_operand.hbm [shape: bf16[8,1024], index: 0, kind: input, shape index: {}]
  %s1 = inlined_call_operand.hbm [shape: bf16[1024,512], index: 1, kind: input, shape index: {}]
  %s2 = inlined_call_operand.hbm [shape: f32[1,512], index: 2, kind: input, shape index: {}]
  %s3 = inlined_call_operand.hbm [shape: f32[1,512], index: 3, kind: input, shape index: {}]
  %s4 = inlined_call_operand.hbm [shape: bf16[512,256], index: 4, kind: input, shape index: {}]
  %s5 = inlined_call_operand.vmem [shape: f32[1,256], index: 5, kind: input, shape index: {}]
  %s6 = inlined_call_operand.vmem [shape: f32[1,256], index: 6, kind: input, shape index: {}]
  %s7 = inlined_call_operand.hbm [shape: bf16[256,128], index: 7, kind: input, shape index: {}]
  %s8 = inlined_call_operand.vmem [shape: f32[1,128], index: 8, kind: input, shape index: {}]
  %s9 = inlined_call_operand.hbm [shape: bf16[128,128], index: 9, kind: input, shape index: {}]
  %s10 = inlined_call_operand.vmem [shape: f32[1,128], index: 10, kind: input, shape index: {}]
  %s11 = inlined_call_operand.hbm [shape: f32[8,128], index: 11, kind: output, shape index: {}]
  %s12 = sld [smem:[#allocation0]]
  $region82: #{tpu_custom_call.1} parent=0
    _
  %s14 = ssub.s32 1, %s12
  %s15 = scalar_select 0, %s14, %s12
  $region1: #{tpu_custom_call.1} parent=0
    #allocation2 [shape = 'u8[16384]{0}', space=vmem, size = 0x4000, scoped, tag = 'input window, operand 0, single buffered']
    #allocation3 [shape = 's32[1]{0}', space=sflag, size = 0x4, scoped, tag = 'scoped memory for tpu_custom_call.1']
    #allocation4 [shape = 's32[1]{0}', space=sflag, size = 0x4, scoped, tag = 'scoped memory for tpu_custom_call.1']
    #allocation5 [shape = 'u8[1048576]{0}', space=vmem, size = 0x100000, scoped, tag = 'input window, operand 1, single buffered']
    #allocation6 [shape = 's32[1]{0}', space=sflag, size = 0x4, scoped, tag = 'scoped memory for tpu_custom_call.1']
    #allocation7 [shape = 'u8[2048]{0}', space=vmem, size = 0x800, scoped, tag = 'input window, operand 2, single buffered']
    #allocation8 [shape = 'u8[2048]{0}', space=vmem, size = 0x800, scoped, tag = 'input window, operand 3, single buffered']
    #allocation9 [shape = 's32[1]{0}', space=sflag, size = 0x4, scoped, tag = 'scoped memory for tpu_custom_call.1']
    #allocation10 [shape = 'u8[262144]{0}', space=vmem, size = 0x40000, scoped, tag = 'input window, operand 4, single buffered']
    #allocation11 [shape = 'u8[65536]{0}', space=vmem, size = 0x10000, scoped, tag = 'input window, operand 7, single buffered']
    #allocation12 [shape = 's32[1]{0}', space=sflag, size = 0x4, scoped, tag = 'scoped memory for tpu_custom_call.1']
    #allocation13 [shape = 'u8[32768]{0}', space=vmem, size = 0x8000, scoped, tag = 'input window, operand 9, single buffered']
    #allocation14 [shape = 'u8[4096]{0}', space=vmem, size = 0x1000, scoped, tag = 'output window, operand 0, single buffered']
    %16 = vsyncpa [#allocation3], 0
    %17 = vsyncpa [#allocation6], 0
    %18 = vsyncpa [#allocation9], 0
    %19 = vsyncpa [#allocation12], 0
    %20 = vsyncpa [#allocation4], 0
    // Predicated region
    $region2: #{tpu_custom_call.1} parent=1 // pred_check
      _
    $region3: #{tpu_custom_call.1} parent=1 // pred_check_branch
      %22 = sbr.rel (0) target = $region5
    $region4: #{tpu_custom_call.1} parent=1 // pred_region
      %24 = vsyncadd [#allocation3], 0
      %s26 = sshll.u32 %s0, 4
      %s27 = int_to_ptr.hbm [resolvable:$true] %s26
      %s28 = sshll.u32 [#allocation2], 4
      %s29 = int_to_ptr.vmem [resolvable:$true] %s28
      %31 = dma.hbm_to_vmem [thread:$0]  %s27, 512, %s29, [#allocation3]
    $region5: #{tpu_custom_call.1} parent=1 // pred_fallthru
      _
    // Predicated region
    $region6: #{tpu_custom_call.1} parent=1 // pred_check
      _
    $region7: #{tpu_custom_call.1} parent=1 // pred_check_branch
      %33 = sbr.rel (0) target = $region9
    $region8: #{tpu_custom_call.1} parent=1 // pred_region
      %35 = vsyncadd [#allocation6], 0
      %s36 = sshll.u32 %s1, 4
      %s37 = int_to_ptr.hbm [resolvable:$true] %s36
      %s38 = sshll.u32 [#allocation5], 4
      %s39 = int_to_ptr.vmem [resolvable:$true] %s38
      %44 = dma.hbm_to_vmem [thread:$0]  %s37, 32768, %s39, [#allocation6], 256, 256, 16
    $region9: #{tpu_custom_call.1} parent=1 // pred_fallthru
      _
    // Predicated region
    $region10: #{tpu_custom_call.1} parent=1 // pred_check
      _
    $region11: #{tpu_custom_call.1} parent=1 // pred_check_branch
      %46 = sbr.rel (0) target = $region13
    $region12: #{tpu_custom_call.1} parent=1 // pred_region
      %48 = vsyncadd [#allocation6], 0
      %s50 = sshll.u32 %s2, 4
      %s51 = int_to_ptr.hbm [resolvable:$true] %s50
      %s52 = sshll.u32 [#allocation7], 4
      %s53 = int_to_ptr.vmem [resolvable:$true] %s52
      %55 = dma.hbm_to_vmem [thread:$0]  %s51, 64, %s53, [#allocation6]
    $region13: #{tpu_custom_call.1} parent=1 // pred_fallthru
      _
    // Predicated region
    $region14: #{tpu_custom_call.1} parent=1 // pred_check
      _
    $region15: #{tpu_custom_call.1} parent=1 // pred_check_branch
      %57 = sbr.rel (0) target = $region17
    $region16: #{tpu_custom_call.1} parent=1 // pred_region
      %59 = vsyncadd [#allocation9], 0
      %s61 = sshll.u32 %s3, 4
      %s62 = int_to_ptr.hbm [resolvable:$true] %s61
      %s63 = sshll.u32 [#allocation8], 4
      %s64 = int_to_ptr.vmem [resolvable:$true] %s63
      %66 = dma.hbm_to_vmem [thread:$0]  %s62, 64, %s64, [#allocation9]
    $region17: #{tpu_custom_call.1} parent=1 // pred_fallthru
      _
    // Predicated region
    $region18: #{tpu_custom_call.1} parent=1 // pred_check
      _
    $region19: #{tpu_custom_call.1} parent=1 // pred_check_branch
      %68 = sbr.rel (0) target = $region21
    $region20: #{tpu_custom_call.1} parent=1 // pred_region
      %70 = vsyncadd [#allocation9], 0
      %s71 = sshll.u32 %s4, 4
      %s72 = int_to_ptr.hbm [resolvable:$true] %s71
      %s73 = sshll.u32 [#allocation10], 4
      %s74 = int_to_ptr.vmem [resolvable:$true] %s73
      %79 = dma.hbm_to_vmem [thread:$0]  %s72, 8192, %s74, [#allocation9], 128, 128, 8
    $region21: #{tpu_custom_call.1} parent=1 // pred_fallthru
      _
    // Predicated region
    $region22: #{tpu_custom_call.1} parent=1 // pred_check
      _
    $region23: #{tpu_custom_call.1} parent=1 // pred_check_branch
      %81 = sbr.rel (0) target = $region25
    $region24: #{tpu_custom_call.1} parent=1 // pred_region
      _
    $region25: #{tpu_custom_call.1} parent=1 // pred_fallthru
      _
    // Predicated region
    $region26: #{tpu_custom_call.1} parent=1 // pred_check
      _
    $region27: #{tpu_custom_call.1} parent=1 // pred_check_branch
      %83 = sbr.rel (0) target = $region29
    $region28: #{tpu_custom_call.1} parent=1 // pred_region
      _
    $region29: #{tpu_custom_call.1} parent=1 // pred_fallthru
      _
    // Predicated region
    $region30: #{tpu_custom_call.1} parent=1 // pred_check
      _
    $region31: #{tpu_custom_call.1} parent=1 // pred_check_branch
      %85 = sbr.rel (0) target = $region33
    $region32: #{tpu_custom_call.1} parent=1 // pred_region
      %87 = vsyncadd [#allocation12], 0
      %s88 = sshll.u32 %s7, 4
      %s89 = int_to_ptr.hbm [resolvable:$true] %s88
      %s90 = sshll.u32 [#allocation11], 4
      %s91 = int_to_ptr.vmem [resolvable:$true] %s90
      %96 = dma.hbm_to_vmem [thread:$0]  %s89, 2048, %s91, [#allocation12], 64, 64, 4
    $region33: #{tpu_custom_call.1} parent=1 // pred_fallthru
      _
    // Predicated region
    $region34: #{tpu_custom_call.1} parent=1 // pred_check
      _
    $region35: #{tpu_custom_call.1} parent=1 // pred_check_branch
      %98 = sbr.rel (0) target = $region37
    $region36: #{tpu_custom_call.1} parent=1 // pred_region
      _
    $region37: #{tpu_custom_call.1} parent=1 // pred_fallthru
      _
    // Predicated region
    $region38: #{tpu_custom_call.1} parent=1 // pred_check
      _
    $region39: #{tpu_custom_call.1} parent=1 // pred_check_branch
      %100 = sbr.rel (0) target = $region41
    $region40: #{tpu_custom_call.1} parent=1 // pred_region
      %102 = vsyncadd [#allocation12], 0
      %s103 = sshll.u32 %s9, 4
      %s104 = int_to_ptr.hbm [resolvable:$true] %s103
      %s105 = sshll.u32 [#allocation13], 4
      %s106 = int_to_ptr.vmem [resolvable:$true] %s105
      %111 = dma.hbm_to_vmem [thread:$0]  %s104, 1024, %s106, [#allocation12], 64, 64, 4
    $region41: #{tpu_custom_call.1} parent=1 // pred_fallthru
      _
    // Predicated region
    $region42: #{tpu_custom_call.1} parent=1 // pred_check
      _
    $region43: #{tpu_custom_call.1} parent=1 // pred_check_branch
      %113 = sbr.rel (0) target = $region45
    $region44: #{tpu_custom_call.1} parent=1 // pred_region
      _
    $region45: #{tpu_custom_call.1} parent=1 // pred_fallthru
      _
    // Predicated region
    $region46: #{tpu_custom_call.1} parent=1 // pred_check
      _
    $region47: #{tpu_custom_call.1} parent=1 // pred_check_branch
      %115 = sbr.rel (0) target = $region49
    $region48: #{tpu_custom_call.1} parent=1 // pred_region
      %117 = dma.done [#allocation3], 512
    $region49: #{tpu_custom_call.1} parent=1 // pred_fallthru
      _
    // Predicated region
    $region50: #{tpu_custom_call.1} parent=1 // pred_check
      _
    $region51: #{tpu_custom_call.1} parent=1 // pred_check_branch
      %119 = sbr.rel (0) target = $region53
    $region52: #{tpu_custom_call.1} parent=1 // pred_region
      %121 = dma.done [#allocation6], 32768
    $region53: #{tpu_custom_call.1} parent=1 // pred_fallthru
      _
    // Predicated region
    $region54: #{tpu_custom_call.1} parent=1 // pred_check
      _
    $region55: #{tpu_custom_call.1} parent=1 // pred_check_branch
      %123 = sbr.rel (0) target = $region57
    $region56: #{tpu_custom_call.1} parent=1 // pred_region
      %125 = dma.done [#allocation6], 64
    $region57: #{tpu_custom_call.1} parent=1 // pred_fallthru
      _
    // Predicated region
    $region58: #{tpu_custom_call.1} parent=1 // pred_check
      _
    $region59: #{tpu_custom_call.1} parent=1 // pred_check_branch
      %127 = sbr.rel (0) target = $region61
    $region60: #{tpu_custom_call.1} parent=1 // pred_region
      %129 = dma.done [#allocation9], 64
    $region61: #{tpu_custom_call.1} parent=1 // pred_fallthru
      _
    // Predicated region
    $region62: #{tpu_custom_call.1} parent=1 // pred_check
      _
    $region63: #{tpu_custom_call.1} parent=1 // pred_check_branch
      %131 = sbr.rel (0) target = $region65
    $region64: #{tpu_custom_call.1} parent=1 // pred_region
      %133 = dma.done [#allocation9], 8192
    $region65: #{tpu_custom_call.1} parent=1 // pred_fallthru
      _
    // Predicated region
    $region66: #{tpu_custom_call.1} parent=1 // pred_check
      _
    $region67: #{tpu_custom_call.1} parent=1 // pred_check_branch
      %135 = sbr.rel (0) target = $region69
    $region68: #{tpu_custom_call.1} parent=1 // pred_region
      %137 = dma.done [#allocation12], 2048
    $region69: #{tpu_custom_call.1} parent=1 // pred_fallthru
      _
    // Predicated region
    $region70: #{tpu_custom_call.1} parent=1 // pred_check
      _
    $region71: #{tpu_custom_call.1} parent=1 // pred_check_branch
      %139 = sbr.rel (0) target = $region73
    $region72: #{tpu_custom_call.1} parent=1 // pred_region
      %141 = dma.done [#allocation12], 1024
    $region73: #{tpu_custom_call.1} parent=1 // pred_fallthru
      _
    %v142 = vld [vmem:[#allocation2] sm:$0xff]
    %v143 = vld [vmem:[#allocation2 + $0x8] sm:$0xff]
    %v144 = vld [vmem:[#allocation2 + $0x10] sm:$0xff]
    %v145 = vld [vmem:[#allocation2 + $0x18] sm:$0xff]
    %v146 = vld [vmem:[#allocation5] sm:$0xff]
    %v147 = vld [vmem:[#allocation5 + $0x8] sm:$0xff]
    %v148 = vld [vmem:[#allocation5 + $0x10] sm:$0xff]
    %v149 = vld [vmem:[#allocation5 + $0x18] sm:$0xff]
    %v150 = vld [vmem:[#allocation5 + $0x20] sm:$0xff]
    %v151 = vld [vmem:[#allocation5 + $0x28] sm:$0xff]
    %v152 = vld [vmem:[#allocation5 + $0x30] sm:$0xff]
    %v153 = vld [vmem:[#allocation5 + $0x38] sm:$0xff]
    %v154 = vld [vmem:[#allocation5 + $0x40] sm:$0xff]
    %v155 = vld [vmem:[#allocation5 + $0x48] sm:$0xff]
    %v156 = vld [vmem:[#allocation5 + $0x50] sm:$0xff]
    %v157 = vld [vmem:[#allocation5 + $0x58] sm:$0xff]
    %v158 = vld [vmem:[#allocation5 + $0x60] sm:$0xff]
    %v159 = vld [vmem:[#allocation5 + $0x68] sm:$0xff]
    %v160 = vld [vmem:[#allocation5 + $0x70] sm:$0xff]
    %v161 = vld [vmem:[#allocation5 + $0x78] sm:$0xff]
    %v162 = vld [vmem:[#allocation5 + $0x80] sm:$0xff]
    %v163 = vld [vmem:[#allocation5 + $0x88] sm:$0xff]
    %v164 = vld [vmem:[#allocation5 + $0x90] sm:$0xff]
    %v165 = vld [vmem:[#allocation5 + $0x98] sm:$0xff]
    %v166 = vld [vmem:[#allocation5 + $0xa0] sm:$0xff]
    %v167 = vld [vmem:[#allocation5 + $0xa8] sm:$0xff]
    %v168 = vld [vmem:[#allocation5 + $0xb0] sm:$0xff]
    %v169 = vld [vmem:[#allocation5 + $0xb8] sm:$0xff]
    %v170 = vld [vmem:[#allocation5 + $0xc0] sm:$0xff]
    %v171 = vld [vmem:[#allocation5 + $0xc8] sm:$0xff]
    %v172 = vld [vmem:[#allocation5 + $0xd0] sm:$0xff]
    %v173 = vld [vmem:[#allocation5 + $0xd8] sm:$0xff]
    %v174 = vld [vmem:[#allocation5 + $0xe0] sm:$0xff]
    %v175 = vld [vmem:[#allocation5 + $0xe8] sm:$0xff]
    %v176 = vld [vmem:[#allocation5 + $0xf0] sm:$0xff]
    %v177 = vld [vmem:[#allocation5 + $0xf8] sm:$0xff]
    %v178 = vld [vmem:[#allocation5 + $0x100] sm:$0xff]
    %v179 = vld [vmem:[#allocation5 + $0x108] sm:$0xff]
    %v180 = vld [vmem:[#allocation5 + $0x110] sm:$0xff]
    %v181 = vld [vmem:[#allocation5 + $0x118] sm:$0xff]
    %v182 = vld [vmem:[#allocation5 + $0x120] sm:$0xff]
    %v183 = vld [vmem:[#allocation5 + $0x128] sm:$0xff]
    %v184 = vld [vmem:[#allocation5 + $0x130] sm:$0xff]
    %v185 = vld [vmem:[#allocation5 + $0x138] sm:$0xff]
    %v186 = vld [vmem:[#allocation5 + $0x140] sm:$0xff]
    %v187 = vld [vmem:[#allocation5 + $0x148] sm:$0xff]
    %v188 = vld [vmem:[#allocation5 + $0x150] sm:$0xff]
    %v189 = vld [vmem:[#allocation5 + $0x158] sm:$0xff]
    %v190 = vld [vmem:[#allocation5 + $0x160] sm:$0xff]
    %v191 = vld [vmem:[#allocation5 + $0x168] sm:$0xff]
    %v192 = vld [vmem:[#allocation5 + $0x170] sm:$0xff]
    %v193 = vld [vmem:[#allocation5 + $0x178] sm:$0xff]
    %v194 = vld [vmem:[#allocation5 + $0x180] sm:$0xff]
    %v195 = vld [vmem:[#allocation5 + $0x188] sm:$0xff]
    %v196 = vld [vmem:[#allocation5 + $0x190] sm:$0xff]
    %v197 = vld [vmem:[#allocation5 + $0x198] sm:$0xff]
    %v198 = vld [vmem:[#allocation5 + $0x1a0] sm:$0xff]
    %v199 = vld [vmem:[#allocation5 + $0x1a8] sm:$0xff]
    %v200 = vld [vmem:[#allocation5 + $0x1b0] sm:$0xff]
    %v201 = vld [vmem:[#allocation5 + $0x1b8] sm:$0xff]
    %v202 = vld [vmem:[#allocation5 + $0x1c0] sm:$0xff]
    %v203 = vld [vmem:[#allocation5 + $0x1c8] sm:$0xff]
    %v204 = vld [vmem:[#allocation5 + $0x1d0] sm:$0xff]
    %v205 = vld [vmem:[#allocation5 + $0x1d8] sm:$0xff]
    %v206 = vld [vmem:[#allocation5 + $0x1e0] sm:$0xff]
    %v207 = vld [vmem:[#allocation5 + $0x1e8] sm:$0xff]
    %v208 = vld [vmem:[#allocation5 + $0x1f0] sm:$0xff]
    %v209 = vld [vmem:[#allocation5 + $0x1f8] sm:$0xff]
    %v210 = vld [vmem:[#allocation5 + $0x200] sm:$0xff]
    %v211 = vld [vmem:[#allocation5 + $0x208] sm:$0xff]
    %v212 = vld [vmem:[#allocation5 + $0x210] sm:$0xff]
    %v213 = vld [vmem:[#allocation5 + $0x218] sm:$0xff]
    %v214 = vld [vmem:[#allocation5 + $0x220] sm:$0xff]
    %v215 = vld [vmem:[#allocation5 + $0x228] sm:$0xff]
    %v216 = vld [vmem:[#allocation5 + $0x230] sm:$0xff]
    %v217 = vld [vmem:[#allocation5 + $0x238] sm:$0xff]
    %v218 = vld [vmem:[#allocation5 + $0x240] sm:$0xff]
    %v219 = vld [vmem:[#allocation5 + $0x248] sm:$0xff]
    %v220 = vld [vmem:[#allocation5 + $0x250] sm:$0xff]
    %v221 = vld [vmem:[#allocation5 + $0x258] sm:$0xff]
    %v222 = vld [vmem:[#allocation5 + $0x260] sm:$0xff]
    %v223 = vld [vmem:[#allocation5 + $0x268] sm:$0xff]
    %v224 = vld [vmem:[#allocation5 + $0x270] sm:$0xff]
    %v225 = vld [vmem:[#allocation5 + $0x278] sm:$0xff]
    %v226 = vld [vmem:[#allocation5 + $0x280] sm:$0xff]
    %v227 = vld [vmem:[#allocation5 + $0x288] sm:$0xff]
    %v228 = vld [vmem:[#allocation5 + $0x290] sm:$0xff]
    %v229 = vld [vmem:[#allocation5 + $0x298] sm:$0xff]
    %v230 = vld [vmem:[#allocation5 + $0x2a0] sm:$0xff]
    %v231 = vld [vmem:[#allocation5 + $0x2a8] sm:$0xff]
    %v232 = vld [vmem:[#allocation5 + $0x2b0] sm:$0xff]
    %v233 = vld [vmem:[#allocation5 + $0x2b8] sm:$0xff]
    %v234 = vld [vmem:[#allocation5 + $0x2c0] sm:$0xff]
    %v235 = vld [vmem:[#allocation5 + $0x2c8] sm:$0xff]
    %v236 = vld [vmem:[#allocation5 + $0x2d0] sm:$0xff]
    %v237 = vld [vmem:[#allocation5 + $0x2d8] sm:$0xff]
    %v238 = vld [vmem:[#allocation5 + $0x2e0] sm:$0xff]
    %v239 = vld [vmem:[#allocation5 + $0x2e8] sm:$0xff]
    %v240 = vld [vmem:[#allocation5 + $0x2f0] sm:$0xff]
    %v241 = vld [vmem:[#allocation5 + $0x2f8] sm:$0xff]
    %v242 = vld [vmem:[#allocation5 + $0x300] sm:$0xff]
    %v243 = vld [vmem:[#allocation5 + $0x308] sm:$0xff]
    %v244 = vld [vmem:[#allocation5 + $0x310] sm:$0xff]
    %v245 = vld [vmem:[#allocation5 + $0x318] sm:$0xff]
    %v246 = vld [vmem:[#allocation5 + $0x320] sm:$0xff]
    %v247 = vld [vmem:[#allocation5 + $0x328] sm:$0xff]
    %v248 = vld [vmem:[#allocation5 + $0x330] sm:$0xff]
    %v249 = vld [vmem:[#allocation5 + $0x338] sm:$0xff]
    %v250 = vld [vmem:[#allocation5 + $0x340] sm:$0xff]
    %v251 = vld [vmem:[#allocation5 + $0x348] sm:$0xff]
    %v252 = vld [vmem:[#allocation5 + $0x350] sm:$0xff]
    %v253 = vld [vmem:[#allocation5 + $0x358] sm:$0xff]
    %v254 = vld [vmem:[#allocation5 + $0x360] sm:$0xff]
    %v255 = vld [vmem:[#allocation5 + $0x368] sm:$0xff]
    %v256 = vld [vmem:[#allocation5 + $0x370] sm:$0xff]
    %v257 = vld [vmem:[#allocation5 + $0x378] sm:$0xff]
    %v258 = vld [vmem:[#allocation5 + $0x380] sm:$0xff]
    %v259 = vld [vmem:[#allocation5 + $0x388] sm:$0xff]
    %v260 = vld [vmem:[#allocation5 + $0x390] sm:$0xff]
    %v261 = vld [vmem:[#allocation5 + $0x398] sm:$0xff]
    %v262 = vld [vmem:[#allocation5 + $0x3a0] sm:$0xff]
    %v263 = vld [vmem:[#allocation5 + $0x3a8] sm:$0xff]
    %v264 = vld [vmem:[#allocation5 + $0x3b0] sm:$0xff]
    %v265 = vld [vmem:[#allocation5 + $0x3b8] sm:$0xff]
    %v266 = vld [vmem:[#allocation5 + $0x3c0] sm:$0xff]
    %v267 = vld [vmem:[#allocation5 + $0x3c8] sm:$0xff]
    %v268 = vld [vmem:[#allocation5 + $0x3d0] sm:$0xff]
    %v269 = vld [vmem:[#allocation5 + $0x3d8] sm:$0xff]
    %v270 = vld [vmem:[#allocation5 + $0x3e0] sm:$0xff]
    %v271 = vld [vmem:[#allocation5 + $0x3e8] sm:$0xff]
    %v272 = vld [vmem:[#allocation5 + $0x3f0] sm:$0xff]
    %v273 = vld [vmem:[#allocation5 + $0x3f8] sm:$0xff]
    %v274 = vld [vmem:[#allocation5 + $0x400] sm:$0xff]
    %v275 = vld [vmem:[#allocation5 + $0x408] sm:$0xff]
    %v276 = vld [vmem:[#allocation5 + $0x410] sm:$0xff]
    %v277 = vld [vmem:[#allocation5 + $0x418] sm:$0xff]
    %v278 = vld [vmem:[#allocation5 + $0x420] sm:$0xff]
    %v279 = vld [vmem:[#allocation5 + $0x428] sm:$0xff]
    %v280 = vld [vmem:[#allocation5 + $0x430] sm:$0xff]
    %v281 = vld [vmem:[#allocation5 + $0x438] sm:$0xff]
    %v282 = vld [vmem:[#allocation5 + $0x440] sm:$0xff]
    %v283 = vld [vmem:[#allocation5 + $0x448] sm:$0xff]
    %v284 = vld [vmem:[#allocation5 + $0x450] sm:$0xff]
    %v285 = vld [vmem:[#allocation5 + $0x458] sm:$0xff]
    %v286 = vld [vmem:[#allocation5 + $0x460] sm:$0xff]
    %v287 = vld [vmem:[#allocation5 + $0x468] sm:$0xff]
    %v288 = vld [vmem:[#allocation5 + $0x470] sm:$0xff]
    %v289 = vld [vmem:[#allocation5 + $0x478] sm:$0xff]
    %v290 = vld [vmem:[#allocation5 + $0x480] sm:$0xff]
    %v291 = vld [vmem:[#allocation5 + $0x488] sm:$0xff]
    %v292 = vld [vmem:[#allocation5 + $0x490] sm:$0xff]
    %v293 = vld [vmem:[#allocation5 + $0x498] sm:$0xff]
    %v294 = vld [vmem:[#allocation5 + $0x4a0] sm:$0xff]
    %v295 = vld [vmem:[#allocation5 + $0x4a8] sm:$0xff]
    %v296 = vld [vmem:[#allocation5 + $0x4b0] sm:$0xff]
    %v297 = vld [vmem:[#allocation5 + $0x4b8] sm:$0xff]
    %v298 = vld [vmem:[#allocation5 + $0x4c0] sm:$0xff]
    %v299 = vld [vmem:[#allocation5 + $0x4c8] sm:$0xff]
    %v300 = vld [vmem:[#allocation5 + $0x4d0] sm:$0xff]
    %v301 = vld [vmem:[#allocation5 + $0x4d8] sm:$0xff]
    %v302 = vld [vmem:[#allocation5 + $0x4e0] sm:$0xff]
    %v303 = vld [vmem:[#allocation5 + $0x4e8] sm:$0xff]
    %v304 = vld [vmem:[#allocation5 + $0x4f0] sm:$0xff]
    %v305 = vld [vmem:[#allocation5 + $0x4f8] sm:$0xff]
    %v306 = vld [vmem:[#allocation5 + $0x500] sm:$0xff]
    %v307 = vld [vmem:[#allocation5 + $0x508] sm:$0xff]
    %v308 = vld [vmem:[#allocation5 + $0x510] sm:$0xff]
    %v309 = vld [vmem:[#allocation5 + $0x518] sm:$0xff]
    %v310 = vld [vmem:[#allocation5 + $0x520] sm:$0xff]
    %v311 = vld [vmem:[#allocation5 + $0x528] sm:$0xff]
    %v312 = vld [vmem:[#allocation5 + $0x530] sm:$0xff]
    %v313 = vld [vmem:[#allocation5 + $0x538] sm:$0xff]
    %v314 = vld [vmem:[#allocation5 + $0x540] sm:$0xff]
    %v315 = vld [vmem:[#allocation5 + $0x548] sm:$0xff]
    %v316 = vld [vmem:[#allocation5 + $0x550] sm:$0xff]
    %v317 = vld [vmem:[#allocation5 + $0x558] sm:$0xff]
    %v318 = vld [vmem:[#allocation5 + $0x560] sm:$0xff]
    %v319 = vld [vmem:[#allocation5 + $0x568] sm:$0xff]
    %v320 = vld [vmem:[#allocation5 + $0x570] sm:$0xff]
    %v321 = vld [vmem:[#allocation5 + $0x578] sm:$0xff]
    %v322 = vld [vmem:[#allocation5 + $0x580] sm:$0xff]
    %v323 = vld [vmem:[#allocation5 + $0x588] sm:$0xff]
    %v324 = vld [vmem:[#allocation5 + $0x590] sm:$0xff]
    %v325 = vld [vmem:[#allocation5 + $0x598] sm:$0xff]
    %v326 = vld [vmem:[#allocation5 + $0x5a0] sm:$0xff]
    %v327 = vld [vmem:[#allocation5 + $0x5a8] sm:$0xff]
    %v328 = vld [vmem:[#allocation5 + $0x5b0] sm:$0xff]
    %v329 = vld [vmem:[#allocation5 + $0x5b8] sm:$0xff]
    %v330 = vld [vmem:[#allocation5 + $0x5c0] sm:$0xff]
    %v331 = vld [vmem:[#allocation5 + $0x5c8] sm:$0xff]
    %v332 = vld [vmem:[#allocation5 + $0x5d0] sm:$0xff]
    %v333 = vld [vmem:[#allocation5 + $0x5d8] sm:$0xff]
    %v334 = vld [vmem:[#allocation5 + $0x5e0] sm:$0xff]
    %v335 = vld [vmem:[#allocation5 + $0x5e8] sm:$0xff]
    %v336 = vld [vmem:[#allocation5 + $0x5f0] sm:$0xff]
    %v337 = vld [vmem:[#allocation5 + $0x5f8] sm:$0xff]
    %v338 = vld [vmem:[#allocation5 + $0x600] sm:$0xff]
    %v339 = vld [vmem:[#allocation5 + $0x608] sm:$0xff]
    %v340 = vld [vmem:[#allocation5 + $0x610] sm:$0xff]
    %v341 = vld [vmem:[#allocation5 + $0x618] sm:$0xff]
    %v342 = vld [vmem:[#allocation5 + $0x620] sm:$0xff]
    %v343 = vld [vmem:[#allocation5 + $0x628] sm:$0xff]
    %v344 = vld [vmem:[#allocation5 + $0x630] sm:$0xff]
    %v345 = vld [vmem:[#allocation5 + $0x638] sm:$0xff]
    %v346 = vld [vmem:[#allocation5 + $0x640] sm:$0xff]
    %v347 = vld [vmem:[#allocation5 + $0x648] sm:$0xff]
    %v348 = vld [vmem:[#allocation5 + $0x650] sm:$0xff]
    %v349 = vld [vmem:[#allocation5 + $0x658] sm:$0xff]
    %v350 = vld [vmem:[#allocation5 + $0x660] sm:$0xff]
    %v351 = vld [vmem:[#allocation5 + $0x668] sm:$0xff]
    %v352 = vld [vmem:[#allocation5 + $0x670] sm:$0xff]
    %v353 = vld [vmem:[#allocation5 + $0x678] sm:$0xff]
    %v354 = vld [vmem:[#allocation5 + $0x680] sm:$0xff]
    %v355 = vld [vmem:[#allocation5 + $0x688] sm:$0xff]
    %v356 = vld [vmem:[#allocation5 + $0x690] sm:$0xff]
    %v357 = vld [vmem:[#allocation5 + $0x698] sm:$0xff]
    %v358 = vld [vmem:[#allocation5 + $0x6a0] sm:$0xff]
    %v359 = vld [vmem:[#allocation5 + $0x6a8] sm:$0xff]
    %v360 = vld [vmem:[#allocation5 + $0x6b0] sm:$0xff]
    %v361 = vld [vmem:[#allocation5 + $0x6b8] sm:$0xff]
    %v362 = vld [vmem:[#allocation5 + $0x6c0] sm:$0xff]
    %v363 = vld [vmem:[#allocation5 + $0x6c8] sm:$0xff]
    %v364 = vld [vmem:[#allocation5 + $0x6d0] sm:$0xff]
    %v365 = vld [vmem:[#allocation5 + $0x6d8] sm:$0xff]
    %v366 = vld [vmem:[#allocation5 + $0x6e0] sm:$0xff]
    %v367 = vld [vmem:[#allocation5 + $0x6e8] sm:$0xff]
    %v368 = vld [vmem:[#allocation5 + $0x6f0] sm:$0xff]
    %v369 = vld [vmem:[#allocation5 + $0x6f8] sm:$0xff]
    %v370 = vld [vmem:[#allocation5 + $0x700] sm:$0xff]
    %v371 = vld [vmem:[#allocation5 + $0x708] sm:$0xff]
    %v372 = vld [vmem:[#allocation5 + $0x710] sm:$0xff]
    %v373 = vld [vmem:[#allocation5 + $0x718] sm:$0xff]
    %v374 = vld [vmem:[#allocation5 + $0x720] sm:$0xff]
    %v375 = vld [vmem:[#allocation5 + $0x728] sm:$0xff]
    %v376 = vld [vmem:[#allocation5 + $0x730] sm:$0xff]
    %v377 = vld [vmem:[#allocation5 + $0x738] sm:$0xff]
    %v378 = vld [vmem:[#allocation5 + $0x740] sm:$0xff]
    %v379 = vld [vmem:[#allocation5 + $0x748] sm:$0xff]
    %v380 = vld [vmem:[#allocation5 + $0x750] sm:$0xff]
    %v381 = vld [vmem:[#allocation5 + $0x758] sm:$0xff]
    %v382 = vld [vmem:[#allocation5 + $0x760] sm:$0xff]
    %v383 = vld [vmem:[#allocation5 + $0x768] sm:$0xff]
    %v384 = vld [vmem:[#allocation5 + $0x770] sm:$0xff]
    %v385 = vld [vmem:[#allocation5 + $0x778] sm:$0xff]
    %v386 = vld [vmem:[#allocation5 + $0x780] sm:$0xff]
    %v387 = vld [vmem:[#allocation5 + $0x788] sm:$0xff]
    %v388 = vld [vmem:[#allocation5 + $0x790] sm:$0xff]
    %v389 = vld [vmem:[#allocation5 + $0x798] sm:$0xff]
    %v390 = vld [vmem:[#allocation5 + $0x7a0] sm:$0xff]
    %v391 = vld [vmem:[#allocation5 + $0x7a8] sm:$0xff]
    %v392 = vld [vmem:[#allocation5 + $0x7b0] sm:$0xff]
    %v393 = vld [vmem:[#allocation5 + $0x7b8] sm:$0xff]
    %v394 = vld [vmem:[#allocation5 + $0x7c0] sm:$0xff]
    %v395 = vld [vmem:[#allocation5 + $0x7c8] sm:$0xff]
    %v396 = vld [vmem:[#allocation5 + $0x7d0] sm:$0xff]
    %v397 = vld [vmem:[#allocation5 + $0x7d8] sm:$0xff]
    %v398 = vld [vmem:[#allocation5 + $0x7e0] sm:$0xff]
    %v399 = vld [vmem:[#allocation5 + $0x7e8] sm:$0xff]
    %v400 = vld [vmem:[#allocation5 + $0x7f0] sm:$0xff]
    %v401 = vld [vmem:[#allocation5 + $0x7f8] sm:$0xff]
    %v406 = vunpack.c.l.b16 %v142
    %v407 = vunpack.c.h.b16 %v142
    %v408 = vunpack.c.l.b16 %v143
    %v409 = vunpack.c.h.b16 %v143
    %v410 = vunpack.c.l.b16 %v144
    %v411 = vunpack.c.h.b16 %v144
    %v412 = vunpack.c.l.b16 %v145
    %v413 = vunpack.c.h.b16 %v145
    %v414 = vpack.c.b16 %v406, %v406
    %v415 = vpack.c.b16 %v407, %v407
    %v416 = vpack.c.b16 %v408, %v408
    %v417 = vpack.c.b16 %v409, %v409
    %v418 = vpack.c.b16 %v410, %v410
    %v419 = vpack.c.b16 %v411, %v411
    %v420 = vpack.c.b16 %v412, %v412
    %v421 = vpack.c.b16 %v413, %v413
    %v686 = vunpack.c.l.b16 %v146
    %v687 = vunpack.c.h.b16 %v146
    %v688 = vunpack.c.l.b16 %v147
    %v689 = vunpack.c.h.b16 %v147
    %v690 = vunpack.c.l.b16 %v148
    %v691 = vunpack.c.h.b16 %v148
    %v692 = vunpack.c.l.b16 %v149
    %v693 = vunpack.c.h.b16 %v149
    %v694 = vunpack.c.l.b16 %v150
    %v695 = vunpack.c.h.b16 %v150
    %v696 = vunpack.c.l.b16 %v151
    %v697 = vunpack.c.h.b16 %v151
    %v698 = vunpack.c.l.b16 %v152
    %v699 = vunpack.c.h.b16 %v152
    %v700 = vunpack.c.l.b16 %v153
    %v701 = vunpack.c.h.b16 %v153
    %v702 = vunpack.c.l.b16 %v154
    %v703 = vunpack.c.h.b16 %v154
    %v704 = vunpack.c.l.b16 %v155
    %v705 = vunpack.c.h.b16 %v155
    %v706 = vunpack.c.l.b16 %v156
    %v707 = vunpack.c.h.b16 %v156
    %v708 = vunpack.c.l.b16 %v157
    %v709 = vunpack.c.h.b16 %v157
    %v710 = vunpack.c.l.b16 %v158
    %v711 = vunpack.c.h.b16 %v158
    %v712 = vunpack.c.l.b16 %v159
    %v713 = vunpack.c.h.b16 %v159
    %v714 = vunpack.c.l.b16 %v160
    %v715 = vunpack.c.h.b16 %v160
    %v716 = vunpack.c.l.b16 %v161
    %v717 = vunpack.c.h.b16 %v161
    %v718 = vunpack.c.l.b16 %v162
    %v719 = vunpack.c.h.b16 %v162
    %v720 = vunpack.c.l.b16 %v163
    %v721 = vunpack.c.h.b16 %v163
    %v722 = vunpack.c.l.b16 %v164
    %v723 = vunpack.c.h.b16 %v164
    %v724 = vunpack.c.l.b16 %v165
    %v725 = vunpack.c.h.b16 %v165
    %v726 = vunpack.c.l.b16 %v166
    %v727 = vunpack.c.h.b16 %v166
    %v728 = vunpack.c.l.b16 %v167
    %v729 = vunpack.c.h.b16 %v167
    %v730 = vunpack.c.l.b16 %v168
    %v731 = vunpack.c.h.b16 %v168
    %v732 = vunpack.c.l.b16 %v169
    %v733 = vunpack.c.h.b16 %v169
    %v734 = vunpack.c.l.b16 %v170
    %v735 = vunpack.c.h.b16 %v170
    %v736 = vunpack.c.l.b16 %v171
    %v737 = vunpack.c.h.b16 %v171
    %v738 = vunpack.c.l.b16 %v172
    %v739 = vunpack.c.h.b16 %v172
    %v740 = vunpack.c.l.b16 %v173
    %v741 = vunpack.c.h.b16 %v173
    %v742 = vunpack.c.l.b16 %v174
    %v743 = vunpack.c.h.b16 %v174
    %v744 = vunpack.c.l.b16 %v175
    %v745 = vunpack.c.h.b16 %v175
    %v746 = vunpack.c.l.b16 %v176
    %v747 = vunpack.c.h.b16 %v176
    %v748 = vunpack.c.l.b16 %v177
    %v749 = vunpack.c.h.b16 %v177
    %v750 = vunpack.c.l.b16 %v178
    %v751 = vunpack.c.h.b16 %v178
    %v752 = vunpack.c.l.b16 %v179
    %v753 = vunpack.c.h.b16 %v179
    %v754 = vunpack.c.l.b16 %v180
    %v755 = vunpack.c.h.b16 %v180
    %v756 = vunpack.c.l.b16 %v181
    %v757 = vunpack.c.h.b16 %v181
    %v758 = vunpack.c.l.b16 %v182
    %v759 = vunpack.c.h.b16 %v182
    %v760 = vunpack.c.l.b16 %v183
    %v761 = vunpack.c.h.b16 %v183
    %v762 = vunpack.c.l.b16 %v184
    %v763 = vunpack.c.h.b16 %v184
    %v764 = vunpack.c.l.b16 %v185
    %v765 = vunpack.c.h.b16 %v185
    %v766 = vunpack.c.l.b16 %v186
    %v767 = vunpack.c.h.b16 %v186
    %v768 = vunpack.c.l.b16 %v187
    %v769 = vunpack.c.h.b16 %v187
    %v770 = vunpack.c.l.b16 %v188
    %v771 = vunpack.c.h.b16 %v188
    %v772 = vunpack.c.l.b16 %v189
    %v773 = vunpack.c.h.b16 %v189
    %v774 = vunpack.c.l.b16 %v190
    %v775 = vunpack.c.h.b16 %v190
    %v776 = vunpack.c.l.b16 %v191
    %v777 = vunpack.c.h.b16 %v191
    %v778 = vunpack.c.l.b16 %v192
    %v779 = vunpack.c.h.b16 %v192
    %v780 = vunpack.c.l.b16 %v193
    %v781 = vunpack.c.h.b16 %v193
    %v782 = vunpack.c.l.b16 %v194
    %v783 = vunpack.c.h.b16 %v194
    %v784 = vunpack.c.l.b16 %v195
    %v785 = vunpack.c.h.b16 %v195
    %v786 = vunpack.c.l.b16 %v196
    %v787 = vunpack.c.h.b16 %v196
    %v788 = vunpack.c.l.b16 %v197
    %v789 = vunpack.c.h.b16 %v197
    %v790 = vunpack.c.l.b16 %v198
    %v791 = vunpack.c.h.b16 %v198
    %v792 = vunpack.c.l.b16 %v199
    %v793 = vunpack.c.h.b16 %v199
    %v794 = vunpack.c.l.b16 %v200
    %v795 = vunpack.c.h.b16 %v200
    %v796 = vunpack.c.l.b16 %v201
    %v797 = vunpack.c.h.b16 %v201
    %v798 = vunpack.c.l.b16 %v202
    %v799 = vunpack.c.h.b16 %v202
    %v800 = vunpack.c.l.b16 %v203
    %v801 = vunpack.c.h.b16 %v203
    %v802 = vunpack.c.l.b16 %v204
    %v803 = vunpack.c.h.b16 %v204
    %v804 = vunpack.c.l.b16 %v205
    %v805 = vunpack.c.h.b16 %v205
    %v806 = vunpack.c.l.b16 %v206
    %v807 = vunpack.c.h.b16 %v206
    %v808 = vunpack.c.l.b16 %v207
    %v809 = vunpack.c.h.b16 %v207
    %v810 = vunpack.c.l.b16 %v208
    %v811 = vunpack.c.h.b16 %v208
    %v812 = vunpack.c.l.b16 %v209
    %v813 = vunpack.c.h.b16 %v209
    %v814 = vunpack.c.l.b16 %v210
    %v815 = vunpack.c.h.b16 %v210
    %v816 = vunpack.c.l.b16 %v211
    %v817 = vunpack.c.h.b16 %v211
    %v818 = vunpack.c.l.b16 %v212
    %v819 = vunpack.c.h.b16 %v212
    %v820 = vunpack.c.l.b16 %v213
    %v821 = vunpack.c.h.b16 %v213
    %v822 = vunpack.c.l.b16 %v214
    %v823 = vunpack.c.h.b16 %v214
    %v824 = vunpack.c.l.b16 %v215
    %v825 = vunpack.c.h.b16 %v215
    %v826 = vunpack.c.l.b16 %v216
    %v827 = vunpack.c.h.b16 %v216
    %v828 = vunpack.c.l.b16 %v217
    %v829 = vunpack.c.h.b16 %v217
    %v830 = vunpack.c.l.b16 %v218
    %v831 = vunpack.c.h.b16 %v218
    %v832 = vunpack.c.l.b16 %v219
    %v833 = vunpack.c.h.b16 %v219
    %v834 = vunpack.c.l.b16 %v220
    %v835 = vunpack.c.h.b16 %v220
    %v836 = vunpack.c.l.b16 %v221
    %v837 = vunpack.c.h.b16 %v221
    %v838 = vunpack.c.l.b16 %v222
    %v839 = vunpack.c.h.b16 %v222
    %v840 = vunpack.c.l.b16 %v223
    %v841 = vunpack.c.h.b16 %v223
    %v842 = vunpack.c.l.b16 %v224
    %v843 = vunpack.c.h.b16 %v224
    %v844 = vunpack.c.l.b16 %v225
    %v845 = vunpack.c.h.b16 %v225
    %v846 = vunpack.c.l.b16 %v226
    %v847 = vunpack.c.h.b16 %v226
    %v848 = vunpack.c.l.b16 %v227
    %v849 = vunpack.c.h.b16 %v227
    %v850 = vunpack.c.l.b16 %v228
    %v851 = vunpack.c.h.b16 %v228
    %v852 = vunpack.c.l.b16 %v229
    %v853 = vunpack.c.h.b16 %v229
    %v854 = vunpack.c.l.b16 %v230
    %v855 = vunpack.c.h.b16 %v230
    %v856 = vunpack.c.l.b16 %v231
    %v857 = vunpack.c.h.b16 %v231
    %v858 = vunpack.c.l.b16 %v232
    %v859 = vunpack.c.h.b16 %v232
    %v860 = vunpack.c.l.b16 %v233
    %v861 = vunpack.c.h.b16 %v233
    %v862 = vunpack.c.l.b16 %v234
    %v863 = vunpack.c.h.b16 %v234
    %v864 = vunpack.c.l.b16 %v235
    %v865 = vunpack.c.h.b16 %v235
    %v866 = vunpack.c.l.b16 %v236
    %v867 = vunpack.c.h.b16 %v236
    %v868 = vunpack.c.l.b16 %v237
    %v869 = vunpack.c.h.b16 %v237
    %v870 = vunpack.c.l.b16 %v238
    %v871 = vunpack.c.h.b16 %v238
    %v872 = vunpack.c.l.b16 %v239
    %v873 = vunpack.c.h.b16 %v239
    %v874 = vunpack.c.l.b16 %v240
    %v875 = vunpack.c.h.b16 %v240
    %v876 = vunpack.c.l.b16 %v241
    %v877 = vunpack.c.h.b16 %v241
    %v878 = vunpack.c.l.b16 %v242
    %v879 = vunpack.c.h.b16 %v242
    %v880 = vunpack.c.l.b16 %v243
    %v881 = vunpack.c.h.b16 %v243
    %v882 = vunpack.c.l.b16 %v244
    %v883 = vunpack.c.h.b16 %v244
    %v884 = vunpack.c.l.b16 %v245
    %v885 = vunpack.c.h.b16 %v245
    %v886 = vunpack.c.l.b16 %v246
    %v887 = vunpack.c.h.b16 %v246
    %v888 = vunpack.c.l.b16 %v247
    %v889 = vunpack.c.h.b16 %v247
    %v890 = vunpack.c.l.b16 %v248
    %v891 = vunpack.c.h.b16 %v248
    %v892 = vunpack.c.l.b16 %v249
    %v893 = vunpack.c.h.b16 %v249
    %v894 = vunpack.c.l.b16 %v250
    %v895 = vunpack.c.h.b16 %v250
    %v896 = vunpack.c.l.b16 %v251
    %v897 = vunpack.c.h.b16 %v251
    %v898 = vunpack.c.l.b16 %v252
    %v899 = vunpack.c.h.b16 %v252
    %v900 = vunpack.c.l.b16 %v253
    %v901 = vunpack.c.h.b16 %v253
    %v902 = vunpack.c.l.b16 %v254
    %v903 = vunpack.c.h.b16 %v254
    %v904 = vunpack.c.l.b16 %v255
    %v905 = vunpack.c.h.b16 %v255
    %v906 = vunpack.c.l.b16 %v256
    %v907 = vunpack.c.h.b16 %v256
    %v908 = vunpack.c.l.b16 %v257
    %v909 = vunpack.c.h.b16 %v257
    %v910 = vunpack.c.l.b16 %v258
    %v911 = vunpack.c.h.b16 %v258
    %v912 = vunpack.c.l.b16 %v259
    %v913 = vunpack.c.h.b16 %v259
    %v914 = vunpack.c.l.b16 %v260
    %v915 = vunpack.c.h.b16 %v260
    %v916 = vunpack.c.l.b16 %v261
    %v917 = vunpack.c.h.b16 %v261
    %v918 = vunpack.c.l.b16 %v262
    %v919 = vunpack.c.h.b16 %v262
    %v920 = vunpack.c.l.b16 %v263
    %v921 = vunpack.c.h.b16 %v263
    %v922 = vunpack.c.l.b16 %v264
    %v923 = vunpack.c.h.b16 %v264
    %v924 = vunpack.c.l.b16 %v265
    %v925 = vunpack.c.h.b16 %v265
    %v926 = vunpack.c.l.b16 %v266
    %v927 = vunpack.c.h.b16 %v266
    %v928 = vunpack.c.l.b16 %v267
    %v929 = vunpack.c.h.b16 %v267
    %v930 = vunpack.c.l.b16 %v268
    %v931 = vunpack.c.h.b16 %v268
    %v932 = vunpack.c.l.b16 %v269
    %v933 = vunpack.c.h.b16 %v269
    %v934 = vunpack.c.l.b16 %v270
    %v935 = vunpack.c.h.b16 %v270
    %v936 = vunpack.c.l.b16 %v271
    %v937 = vunpack.c.h.b16 %v271
    %v938 = vunpack.c.l.b16 %v272
    %v939 = vunpack.c.h.b16 %v272
    %v940 = vunpack.c.l.b16 %v273
    %v941 = vunpack.c.h.b16 %v273
    %v942 = vunpack.c.l.b16 %v274
    %v943 = vunpack.c.h.b16 %v274
    %v944 = vunpack.c.l.b16 %v275
    %v945 = vunpack.c.h.b16 %v275
    %v946 = vunpack.c.l.b16 %v276
    %v947 = vunpack.c.h.b16 %v276
    %v948 = vunpack.c.l.b16 %v277
    %v949 = vunpack.c.h.b16 %v277
    %v950 = vunpack.c.l.b16 %v278
    %v951 = vunpack.c.h.b16 %v278
    %v952 = vunpack.c.l.b16 %v279
    %v953 = vunpack.c.h.b16 %v279
    %v954 = vunpack.c.l.b16 %v280
    %v955 = vunpack.c.h.b16 %v280
    %v956 = vunpack.c.l.b16 %v281
    %v957 = vunpack.c.h.b16 %v281
    %v958 = vunpack.c.l.b16 %v282
    %v959 = vunpack.c.h.b16 %v282
    %v960 = vunpack.c.l.b16 %v283
    %v961 = vunpack.c.h.b16 %v283
    %v962 = vunpack.c.l.b16 %v284
    %v963 = vunpack.c.h.b16 %v284
    %v964 = vunpack.c.l.b16 %v285
    %v965 = vunpack.c.h.b16 %v285
    %v966 = vunpack.c.l.b16 %v286
    %v967 = vunpack.c.h.b16 %v286
    %v968 = vunpack.c.l.b16 %v287
    %v969 = vunpack.c.h.b16 %v287
    %v970 = vunpack.c.l.b16 %v288
    %v971 = vunpack.c.h.b16 %v288
    %v972 = vunpack.c.l.b16 %v289
    %v973 = vunpack.c.h.b16 %v289
    %v974 = vunpack.c.l.b16 %v290
    %v975 = vunpack.c.h.b16 %v290
    %v976 = vunpack.c.l.b16 %v291
    %v977 = vunpack.c.h.b16 %v291
    %v978 = vunpack.c.l.b16 %v292
    %v979 = vunpack.c.h.b16 %v292
    %v980 = vunpack.c.l.b16 %v293
    %v981 = vunpack.c.h.b16 %v293
    %v982 = vunpack.c.l.b16 %v294
    %v983 = vunpack.c.h.b16 %v294
    %v984 = vunpack.c.l.b16 %v295
    %v985 = vunpack.c.h.b16 %v295
    %v986 = vunpack.c.l.b16 %v296
    %v987 = vunpack.c.h.b16 %v296
    %v988 = vunpack.c.l.b16 %v297
    %v989 = vunpack.c.h.b16 %v297
    %v990 = vunpack.c.l.b16 %v298
    %v991 = vunpack.c.h.b16 %v298
    %v992 = vunpack.c.l.b16 %v299
    %v993 = vunpack.c.h.b16 %v299
    %v994 = vunpack.c.l.b16 %v300
    %v995 = vunpack.c.h.b16 %v300
    %v996 = vunpack.c.l.b16 %v301
    %v997 = vunpack.c.h.b16 %v301
    %v998 = vunpack.c.l.b16 %v302
    %v999 = vunpack.c.h.b16 %v302
    %v1000 = vunpack.c.l.b16 %v303
    %v1001 = vunpack.c.h.b16 %v303
    %v1002 = vunpack.c.l.b16 %v304
    %v1003 = vunpack.c.h.b16 %v304
    %v1004 = vunpack.c.l.b16 %v305
    %v1005 = vunpack.c.h.b16 %v305
    %v1006 = vunpack.c.l.b16 %v306
    %v1007 = vunpack.c.h.b16 %v306
    %v1008 = vunpack.c.l.b16 %v307
    %v1009 = vunpack.c.h.b16 %v307
    %v1010 = vunpack.c.l.b16 %v308
    %v1011 = vunpack.c.h.b16 %v308
    %v1012 = vunpack.c.l.b16 %v309
    %v1013 = vunpack.c.h.b16 %v309
    %v1014 = vunpack.c.l.b16 %v310
    %v1015 = vunpack.c.h.b16 %v310
    %v1016 = vunpack.c.l.b16 %v311
    %v1017 = vunpack.c.h.b16 %v311
    %v1018 = vunpack.c.l.b16 %v312
    %v1019 = vunpack.c.h.b16 %v312
    %v1020 = vunpack.c.l.b16 %v313
    %v1021 = vunpack.c.h.b16 %v313
    %v1022 = vunpack.c.l.b16 %v314
    %v1023 = vunpack.c.h.b16 %v314
    %v1024 = vunpack.c.l.b16 %v315
    %v1025 = vunpack.c.h.b16 %v315
    %v1026 = vunpack.c.l.b16 %v316
    %v1027 = vunpack.c.h.b16 %v316
    %v1028 = vunpack.c.l.b16 %v317
    %v1029 = vunpack.c.h.b16 %v317
    %v1030 = vunpack.c.l.b16 %v318
    %v1031 = vunpack.c.h.b16 %v318
    %v1032 = vunpack.c.l.b16 %v319
    %v1033 = vunpack.c.h.b16 %v319
    %v1034 = vunpack.c.l.b16 %v320
    %v1035 = vunpack.c.h.b16 %v320
    %v1036 = vunpack.c.l.b16 %v321
    %v1037 = vunpack.c.h.b16 %v321
    %v1038 = vunpack.c.l.b16 %v322
    %v1039 = vunpack.c.h.b16 %v322
    %v1040 = vunpack.c.l.b16 %v323
    %v1041 = vunpack.c.h.b16 %v323
    %v1042 = vunpack.c.l.b16 %v324
    %v1043 = vunpack.c.h.b16 %v324
    %v1044 = vunpack.c.l.b16 %v325
    %v1045 = vunpack.c.h.b16 %v325
    %v1046 = vunpack.c.l.b16 %v326
    %v1047 = vunpack.c.h.b16 %v326
    %v1048 = vunpack.c.l.b16 %v327
    %v1049 = vunpack.c.h.b16 %v327
    %v1050 = vunpack.c.l.b16 %v328
    %v1051 = vunpack.c.h.b16 %v328
    %v1052 = vunpack.c.l.b16 %v329
    %v1053 = vunpack.c.h.b16 %v329
    %v1054 = vunpack.c.l.b16 %v330
    %v1055 = vunpack.c.h.b16 %v330
    %v1056 = vunpack.c.l.b16 %v331
    %v1057 = vunpack.c.h.b16 %v331
    %v1058 = vunpack.c.l.b16 %v332
    %v1059 = vunpack.c.h.b16 %v332
    %v1060 = vunpack.c.l.b16 %v333
    %v1061 = vunpack.c.h.b16 %v333
    %v1062 = vunpack.c.l.b16 %v334
    %v1063 = vunpack.c.h.b16 %v334
    %v1064 = vunpack.c.l.b16 %v335
    %v1065 = vunpack.c.h.b16 %v335
    %v1066 = vunpack.c.l.b16 %v336
    %v1067 = vunpack.c.h.b16 %v336
    %v1068 = vunpack.c.l.b16 %v337
    %v1069 = vunpack.c.h.b16 %v337
    %v1070 = vunpack.c.l.b16 %v338
    %v1071 = vunpack.c.h.b16 %v338
    %v1072 = vunpack.c.l.b16 %v339
    %v1073 = vunpack.c.h.b16 %v339
    %v1074 = vunpack.c.l.b16 %v340
    %v1075 = vunpack.c.h.b16 %v340
    %v1076 = vunpack.c.l.b16 %v341
    %v1077 = vunpack.c.h.b16 %v341
    %v1078 = vunpack.c.l.b16 %v342
    %v1079 = vunpack.c.h.b16 %v342
    %v1080 = vunpack.c.l.b16 %v343
    %v1081 = vunpack.c.h.b16 %v343
    %v1082 = vunpack.c.l.b16 %v344
    %v1083 = vunpack.c.h.b16 %v344
    %v1084 = vunpack.c.l.b16 %v345
    %v1085 = vunpack.c.h.b16 %v345
    %v1086 = vunpack.c.l.b16 %v346
    %v1087 = vunpack.c.h.b16 %v346
    %v1088 = vunpack.c.l.b16 %v347
    %v1089 = vunpack.c.h.b16 %v347
    %v1090 = vunpack.c.l.b16 %v348
    %v1091 = vunpack.c.h.b16 %v348
    %v1092 = vunpack.c.l.b16 %v349
    %v1093 = vunpack.c.h.b16 %v349
    %v1094 = vunpack.c.l.b16 %v350
    %v1095 = vunpack.c.h.b16 %v350
    %v1096 = vunpack.c.l.b16 %v351
    %v1097 = vunpack.c.h.b16 %v351
    %v1098 = vunpack.c.l.b16 %v352
    %v1099 = vunpack.c.h.b16 %v352
    %v1100 = vunpack.c.l.b16 %v353
    %v1101 = vunpack.c.h.b16 %v353
    %v1102 = vunpack.c.l.b16 %v354
    %v1103 = vunpack.c.h.b16 %v354
    %v1104 = vunpack.c.l.b16 %v355
    %v1105 = vunpack.c.h.b16 %v355
    %v1106 = vunpack.c.l.b16 %v356
    %v1107 = vunpack.c.h.b16 %v356
    %v1108 = vunpack.c.l.b16 %v357
    %v1109 = vunpack.c.h.b16 %v357
    %v1110 = vunpack.c.l.b16 %v358
    %v1111 = vunpack.c.h.b16 %v358
    %v1112 = vunpack.c.l.b16 %v359
    %v1113 = vunpack.c.h.b16 %v359
    %v1114 = vunpack.c.l.b16 %v360
    %v1115 = vunpack.c.h.b16 %v360
    %v1116 = vunpack.c.l.b16 %v361
    %v1117 = vunpack.c.h.b16 %v361
    %v1118 = vunpack.c.l.b16 %v362
    %v1119 = vunpack.c.h.b16 %v362
    %v1120 = vunpack.c.l.b16 %v363
    %v1121 = vunpack.c.h.b16 %v363
    %v1122 = vunpack.c.l.b16 %v364
    %v1123 = vunpack.c.h.b16 %v364
    %v1124 = vunpack.c.l.b16 %v365
    %v1125 = vunpack.c.h.b16 %v365
    %v1126 = vunpack.c.l.b16 %v366
    %v1127 = vunpack.c.h.b16 %v366
    %v1128 = vunpack.c.l.b16 %v367
    %v1129 = vunpack.c.h.b16 %v367
    %v1130 = vunpack.c.l.b16 %v368
    %v1131 = vunpack.c.h.b16 %v368
    %v1132 = vunpack.c.l.b16 %v369
    %v1133 = vunpack.c.h.b16 %v369
    %v1134 = vunpack.c.l.b16 %v370
    %v1135 = vunpack.c.h.b16 %v370
    %v1136 = vunpack.c.l.b16 %v371
    %v1137 = vunpack.c.h.b16 %v371
    %v1138 = vunpack.c.l.b16 %v372
    %v1139 = vunpack.c.h.b16 %v372
    %v1140 = vunpack.c.l.b16 %v373
    %v1141 = vunpack.c.h.b16 %v373
    %v1142 = vunpack.c.l.b16 %v374
    %v1143 = vunpack.c.h.b16 %v374
    %v1144 = vunpack.c.l.b16 %v375
    %v1145 = vunpack.c.h.b16 %v375
    %v1146 = vunpack.c.l.b16 %v376
    %v1147 = vunpack.c.h.b16 %v376
    %v1148 = vunpack.c.l.b16 %v377
    %v1149 = vunpack.c.h.b16 %v377
    %v1150 = vunpack.c.l.b16 %v378
    %v1151 = vunpack.c.h.b16 %v378
    %v1152 = vunpack.c.l.b16 %v379
    %v1153 = vunpack.c.h.b16 %v379
    %v1154 = vunpack.c.l.b16 %v380
    %v1155 = vunpack.c.h.b16 %v380
    %v1156 = vunpack.c.l.b16 %v381
    %v1157 = vunpack.c.h.b16 %v381
    %v1158 = vunpack.c.l.b16 %v382
    %v1159 = vunpack.c.h.b16 %v382
    %v1160 = vunpack.c.l.b16 %v383
    %v1161 = vunpack.c.h.b16 %v383
    %v1162 = vunpack.c.l.b16 %v384
    %v1163 = vunpack.c.h.b16 %v384
    %v1164 = vunpack.c.l.b16 %v385
    %v1165 = vunpack.c.h.b16 %v385
    %v1166 = vunpack.c.l.b16 %v386
    %v1167 = vunpack.c.h.b16 %v386
    %v1168 = vunpack.c.l.b16 %v387
    %v1169 = vunpack.c.h.b16 %v387
    %v1170 = vunpack.c.l.b16 %v388
    %v1171 = vunpack.c.h.b16 %v388
    %v1172 = vunpack.c.l.b16 %v389
    %v1173 = vunpack.c.h.b16 %v389
    %v1174 = vunpack.c.l.b16 %v390
    %v1175 = vunpack.c.h.b16 %v390
    %v1176 = vunpack.c.l.b16 %v391
    %v1177 = vunpack.c.h.b16 %v391
    %v1178 = vunpack.c.l.b16 %v392
    %v1179 = vunpack.c.h.b16 %v392
    %v1180 = vunpack.c.l.b16 %v393
    %v1181 = vunpack.c.h.b16 %v393
    %v1182 = vunpack.c.l.b16 %v394
    %v1183 = vunpack.c.h.b16 %v394
    %v1184 = vunpack.c.l.b16 %v395
    %v1185 = vunpack.c.h.b16 %v395
    %v1186 = vunpack.c.l.b16 %v396
    %v1187 = vunpack.c.h.b16 %v396
    %v1188 = vunpack.c.l.b16 %v397
    %v1189 = vunpack.c.h.b16 %v397
    %v1190 = vunpack.c.l.b16 %v398
    %v1191 = vunpack.c.h.b16 %v398
    %v1192 = vunpack.c.l.b16 %v399
    %v1193 = vunpack.c.h.b16 %v399
    %v1194 = vunpack.c.l.b16 %v400
    %v1195 = vunpack.c.h.b16 %v400
    %v1196 = vunpack.c.l.b16 %v401
    %v1197 = vunpack.c.h.b16 %v401
    %v1198 = vpack.c.b16 %v690, %v686
    %v1199 = vpack.c.b16 %v691, %v687
    %v1200 = vpack.c.b16 %v692, %v688
    %v1201 = vpack.c.b16 %v693, %v689
    %v1202 = vpack.c.b16 %v698, %v694
    %v1203 = vpack.c.b16 %v699, %v695
    %v1204 = vpack.c.b16 %v700, %v696
    %v1205 = vpack.c.b16 %v701, %v697
    %v1206 = vpack.c.b16 %v706, %v702
    %v1207 = vpack.c.b16 %v707, %v703
    %v1208 = vpack.c.b16 %v708, %v704
    %v1209 = vpack.c.b16 %v709, %v705
    %v1210 = vpack.c.b16 %v714, %v710
    %v1211 = vpack.c.b16 %v715, %v711
    %v1212 = vpack.c.b16 %v716, %v712
    %v1213 = vpack.c.b16 %v717, %v713
    %v1214 = vpack.c.b16 %v722, %v718
    %v1215 = vpack.c.b16 %v723, %v719
    %v1216 = vpack.c.b16 %v724, %v720
    %v1217 = vpack.c.b16 %v725, %v721
    %v1218 = vpack.c.b16 %v730, %v726
    %v1219 = vpack.c.b16 %v731, %v727
    %v1220 = vpack.c.b16 %v732, %v728
    %v1221 = vpack.c.b16 %v733, %v729
    %v1222 = vpack.c.b16 %v738, %v734
    %v1223 = vpack.c.b16 %v739, %v735
    %v1224 = vpack.c.b16 %v740, %v736
    %v1225 = vpack.c.b16 %v741, %v737
    %v1226 = vpack.c.b16 %v746, %v742
    %v1227 = vpack.c.b16 %v747, %v743
    %v1228 = vpack.c.b16 %v748, %v744
    %v1229 = vpack.c.b16 %v749, %v745
    %v1230 = vpack.c.b16 %v754, %v750
    %v1231 = vpack.c.b16 %v755, %v751
    %v1232 = vpack.c.b16 %v756, %v752
    %v1233 = vpack.c.b16 %v757, %v753
    %v1234 = vpack.c.b16 %v762, %v758
    %v1235 = vpack.c.b16 %v763, %v759
    %v1236 = vpack.c.b16 %v764, %v760
    %v1237 = vpack.c.b16 %v765, %v761
    %v1238 = vpack.c.b16 %v770, %v766
    %v1239 = vpack.c.b16 %v771, %v767
    %v1240 = vpack.c.b16 %v772, %v768
    %v1241 = vpack.c.b16 %v773, %v769
    %v1242 = vpack.c.b16 %v778, %v774
    %v1243 = vpack.c.b16 %v779, %v775
    %v1244 = vpack.c.b16 %v780, %v776
    %v1245 = vpack.c.b16 %v781, %v777
    %v1246 = vpack.c.b16 %v786, %v782
    %v1247 = vpack.c.b16 %v787, %v783
    %v1248 = vpack.c.b16 %v788, %v784
    %v1249 = vpack.c.b16 %v789, %v785
    %v1250 = vpack.c.b16 %v794, %v790
    %v1251 = vpack.c.b16 %v795, %v791
    %v1252 = vpack.c.b16 %v796, %v792
    %v1253 = vpack.c.b16 %v797, %v793
    %v1254 = vpack.c.b16 %v802, %v798
    %v1255 = vpack.c.b16 %v803, %v799
    %v1256 = vpack.c.b16 %v804, %v800
    %v1257 = vpack.c.b16 %v805, %v801
    %v1258 = vpack.c.b16 %v810, %v806
    %v1259 = vpack.c.b16 %v811, %v807
    %v1260 = vpack.c.b16 %v812, %v808
    %v1261 = vpack.c.b16 %v813, %v809
    %v1262 = vpack.c.b16 %v818, %v814
    %v1263 = vpack.c.b16 %v819, %v815
    %v1264 = vpack.c.b16 %v820, %v816
    %v1265 = vpack.c.b16 %v821, %v817
    %v1266 = vpack.c.b16 %v826, %v822
    %v1267 = vpack.c.b16 %v827, %v823
    %v1268 = vpack.c.b16 %v828, %v824
    %v1269 = vpack.c.b16 %v829, %v825
    %v1270 = vpack.c.b16 %v834, %v830
    %v1271 = vpack.c.b16 %v835, %v831
    %v1272 = vpack.c.b16 %v836, %v832
    %v1273 = vpack.c.b16 %v837, %v833
    %v1274 = vpack.c.b16 %v842, %v838
    %v1275 = vpack.c.b16 %v843, %v839
    %v1276 = vpack.c.b16 %v844, %v840
    %v1277 = vpack.c.b16 %v845, %v841
    %v1278 = vpack.c.b16 %v850, %v846
    %v1279 = vpack.c.b16 %v851, %v847
    %v1280 = vpack.c.b16 %v852, %v848
    %v1281 = vpack.c.b16 %v853, %v849
    %v1282 = vpack.c.b16 %v858, %v854
    %v1283 = vpack.c.b16 %v859, %v855
    %v1284 = vpack.c.b16 %v860, %v856
    %v1285 = vpack.c.b16 %v861, %v857
    %v1286 = vpack.c.b16 %v866, %v862
    %v1287 = vpack.c.b16 %v867, %v863
    %v1288 = vpack.c.b16 %v868, %v864
    %v1289 = vpack.c.b16 %v869, %v865
    %v1290 = vpack.c.b16 %v874, %v870
    %v1291 = vpack.c.b16 %v875, %v871
    %v1292 = vpack.c.b16 %v876, %v872
    %v1293 = vpack.c.b16 %v877, %v873
    %v1294 = vpack.c.b16 %v882, %v878
    %v1295 = vpack.c.b16 %v883, %v879
    %v1296 = vpack.c.b16 %v884, %v880
    %v1297 = vpack.c.b16 %v885, %v881
    %v1298 = vpack.c.b16 %v890, %v886
    %v1299 = vpack.c.b16 %v891, %v887
    %v1300 = vpack.c.b16 %v892, %v888
    %v1301 = vpack.c.b16 %v893, %v889
    %v1302 = vpack.c.b16 %v898, %v894
    %v1303 = vpack.c.b16 %v899, %v895
    %v1304 = vpack.c.b16 %v900, %v896
    %v1305 = vpack.c.b16 %v901, %v897
    %v1306 = vpack.c.b16 %v906, %v902
    %v1307 = vpack.c.b16 %v907, %v903
    %v1308 = vpack.c.b16 %v908, %v904
    %v1309 = vpack.c.b16 %v909, %v905
    %v1310 = vpack.c.b16 %v914, %v910
    %v1311 = vpack.c.b16 %v915, %v911
    %v1312 = vpack.c.b16 %v916, %v912
    %v1313 = vpack.c.b16 %v917, %v913
    %v1314 = vpack.c.b16 %v922, %v918
    %v1315 = vpack.c.b16 %v923, %v919
    %v1316 = vpack.c.b16 %v924, %v920
    %v1317 = vpack.c.b16 %v925, %v921
    %v1318 = vpack.c.b16 %v930, %v926
    %v1319 = vpack.c.b16 %v931, %v927
    %v1320 = vpack.c.b16 %v932, %v928
    %v1321 = vpack.c.b16 %v933, %v929
    %v1322 = vpack.c.b16 %v938, %v934
    %v1323 = vpack.c.b16 %v939, %v935
    %v1324 = vpack.c.b16 %v940, %v936
    %v1325 = vpack.c.b16 %v941, %v937
    %v1326 = vpack.c.b16 %v946, %v942
    %v1327 = vpack.c.b16 %v947, %v943
    %v1328 = vpack.c.b16 %v948, %v944
    %v1329 = vpack.c.b16 %v949, %v945
    %v1330 = vpack.c.b16 %v954, %v950
    %v1331 = vpack.c.b16 %v955, %v951
    %v1332 = vpack.c.b16 %v956, %v952
    %v1333 = vpack.c.b16 %v957, %v953
    %v1334 = vpack.c.b16 %v962, %v958
    %v1335 = vpack.c.b16 %v963, %v959
    %v1336 = vpack.c.b16 %v964, %v960
    %v1337 = vpack.c.b16 %v965, %v961
    %v1338 = vpack.c.b16 %v970, %v966
    %v1339 = vpack.c.b16 %v971, %v967
    %v1340 = vpack.c.b16 %v972, %v968
    %v1341 = vpack.c.b16 %v973, %v969
    %v1342 = vpack.c.b16 %v978, %v974
    %v1343 = vpack.c.b16 %v979, %v975
    %v1344 = vpack.c.b16 %v980, %v976
    %v1345 = vpack.c.b16 %v981, %v977
    %v1346 = vpack.c.b16 %v986, %v982
    %v1347 = vpack.c.b16 %v987, %v983
    %v1348 = vpack.c.b16 %v988, %v984
    %v1349 = vpack.c.b16 %v989, %v985
    %v1350 = vpack.c.b16 %v994, %v990
    %v1351 = vpack.c.b16 %v995, %v991
    %v1352 = vpack.c.b16 %v996, %v992
    %v1353 = vpack.c.b16 %v997, %v993
    %v1354 = vpack.c.b16 %v1002, %v998
    %v1355 = vpack.c.b16 %v1003, %v999
    %v1356 = vpack.c.b16 %v1004, %v1000
    %v1357 = vpack.c.b16 %v1005, %v1001
    %v1358 = vpack.c.b16 %v1010, %v1006
    %v1359 = vpack.c.b16 %v1011, %v1007
    %v1360 = vpack.c.b16 %v1012, %v1008
    %v1361 = vpack.c.b16 %v1013, %v1009
    %v1362 = vpack.c.b16 %v1018, %v1014
    %v1363 = vpack.c.b16 %v1019, %v1015
    %v1364 = vpack.c.b16 %v1020, %v1016
    %v1365 = vpack.c.b16 %v1021, %v1017
    %v1366 = vpack.c.b16 %v1026, %v1022
    %v1367 = vpack.c.b16 %v1027, %v1023
    %v1368 = vpack.c.b16 %v1028, %v1024
    %v1369 = vpack.c.b16 %v1029, %v1025
    %v1370 = vpack.c.b16 %v1034, %v1030
    %v1371 = vpack.c.b16 %v1035, %v1031
    %v1372 = vpack.c.b16 %v1036, %v1032
    %v1373 = vpack.c.b16 %v1037, %v1033
    %v1374 = vpack.c.b16 %v1042, %v1038
    %v1375 = vpack.c.b16 %v1043, %v1039
    %v1376 = vpack.c.b16 %v1044, %v1040
    %v1377 = vpack.c.b16 %v1045, %v1041
    %v1378 = vpack.c.b16 %v1050, %v1046
    %v1379 = vpack.c.b16 %v1051, %v1047
    %v1380 = vpack.c.b16 %v1052, %v1048
    %v1381 = vpack.c.b16 %v1053, %v1049
    %v1382 = vpack.c.b16 %v1058, %v1054
    %v1383 = vpack.c.b16 %v1059, %v1055
    %v1384 = vpack.c.b16 %v1060, %v1056
    %v1385 = vpack.c.b16 %v1061, %v1057
    %v1386 = vpack.c.b16 %v1066, %v1062
    %v1387 = vpack.c.b16 %v1067, %v1063
    %v1388 = vpack.c.b16 %v1068, %v1064
    %v1389 = vpack.c.b16 %v1069, %v1065
    %v1390 = vpack.c.b16 %v1074, %v1070
    %v1391 = vpack.c.b16 %v1075, %v1071
    %v1392 = vpack.c.b16 %v1076, %v1072
    %v1393 = vpack.c.b16 %v1077, %v1073
    %v1394 = vpack.c.b16 %v1082, %v1078
    %v1395 = vpack.c.b16 %v1083, %v1079
    %v1396 = vpack.c.b16 %v1084, %v1080
    %v1397 = vpack.c.b16 %v1085, %v1081
    %v1398 = vpack.c.b16 %v1090, %v1086
    %v1399 = vpack.c.b16 %v1091, %v1087
    %v1400 = vpack.c.b16 %v1092, %v1088
    %v1401 = vpack.c.b16 %v1093, %v1089
    %v1402 = vpack.c.b16 %v1098, %v1094
    %v1403 = vpack.c.b16 %v1099, %v1095
    %v1404 = vpack.c.b16 %v1100, %v1096
    %v1405 = vpack.c.b16 %v1101, %v1097
    %v1406 = vpack.c.b16 %v1106, %v1102
    %v1407 = vpack.c.b16 %v1107, %v1103
    %v1408 = vpack.c.b16 %v1108, %v1104
    %v1409 = vpack.c.b16 %v1109, %v1105
    %v1410 = vpack.c.b16 %v1114, %v1110
    %v1411 = vpack.c.b16 %v1115, %v1111
    %v1412 = vpack.c.b16 %v1116, %v1112
    %v1413 = vpack.c.b16 %v1117, %v1113
    %v1414 = vpack.c.b16 %v1122, %v1118
    %v1415 = vpack.c.b16 %v1123, %v1119
    %v1416 = vpack.c.b16 %v1124, %v1120
    %v1417 = vpack.c.b16 %v1125, %v1121
    %v1418 = vpack.c.b16 %v1130, %v1126
    %v1419 = vpack.c.b16 %v1131, %v1127
    %v1420 = vpack.c.b16 %v1132, %v1128
    %v1421 = vpack.c.b16 %v1133, %v1129
    %v1422 = vpack.c.b16 %v1138, %v1134
    %v1423 = vpack.c.b16 %v1139, %v1135
    %v1424 = vpack.c.b16 %v1140, %v1136
    %v1425 = vpack.c.b16 %v1141, %v1137
    %v1426 = vpack.c.b16 %v1146, %v1142
    %v1427 = vpack.c.b16 %v1147, %v1143
    %v1428 = vpack.c.b16 %v1148, %v1144
    %v1429 = vpack.c.b16 %v1149, %v1145
    %v1430 = vpack.c.b16 %v1154, %v1150
    %v1431 = vpack.c.b16 %v1155, %v1151
    %v1432 = vpack.c.b16 %v1156, %v1152
    %v1433 = vpack.c.b16 %v1157, %v1153
    %v1434 = vpack.c.b16 %v1162, %v1158
    %v1435 = vpack.c.b16 %v1163, %v1159
    %v1436 = vpack.c.b16 %v1164, %v1160
    %v1437 = vpack.c.b16 %v1165, %v1161
    %v1438 = vpack.c.b16 %v1170, %v1166
    %v1439 = vpack.c.b16 %v1171, %v1167
    %v1440 = vpack.c.b16 %v1172, %v1168
    %v1441 = vpack.c.b16 %v1173, %v1169
    %v1442 = vpack.c.b16 %v1178, %v1174
    %v1443 = vpack.c.b16 %v1179, %v1175
    %v1444 = vpack.c.b16 %v1180, %v1176
    %v1445 = vpack.c.b16 %v1181, %v1177
    %v1446 = vpack.c.b16 %v1186, %v1182
    %v1447 = vpack.c.b16 %v1187, %v1183
    %v1448 = vpack.c.b16 %v1188, %v1184
    %v1449 = vpack.c.b16 %v1189, %v1185
    %v1450 = vpack.c.b16 %v1194, %v1190
    %v1451 = vpack.c.b16 %v1195, %v1191
    %v1452 = vpack.c.b16 %v1196, %v1192
    %v1453 = vpack.c.b16 %v1197, %v1193
    %1710 = vmatpush.bf16.msra.mxu0 %v1226
    %1711 = vmatpush.bf16.msra.mxu0 %v1222
    %1712 = vmatpush.bf16.msra.mxu0 %v1218
    %1713 = vmatpush.bf16.msra.mxu0 %v1214
    %1714 = vmatpush.bf16.msra.mxu0 %v1210
    %1715 = vmatpush.bf16.msra.mxu0 %v1206
    %1716 = vmatpush.bf16.msra.mxu0 %v1202
    %1717 = vmatpush.bf16.msra.mxu0 %v1198
    %1718 = vmatmul.bf16.gmra.mxu0 %v414
    %v1719 = vpop.f32.mrf.mxu0
    %v1720 = vadd.f32 0.0, %v1719
    %v1721 = vpop.f32.mrf.mxu0
    %1722 = vdwg.mxu0
    %1723 = vmatpush.bf16.msra.mxu0 %v1258
    %1724 = vmatpush.bf16.msra.mxu0 %v1254
    %1725 = vmatpush.bf16.msra.mxu0 %v1250
    %1726 = vmatpush.bf16.msra.mxu0 %v1246
    %1727 = vmatpush.bf16.msra.mxu0 %v1242
    %1728 = vmatpush.bf16.msra.mxu0 %v1238
    %1729 = vmatpush.bf16.msra.mxu0 %v1234
    %1730 = vmatpush.bf16.msra.mxu0 %v1230
    %1731 = vmatmul.bf16.gmra.mxu0 %v415
    %v1732 = vpop.f32.mrf.mxu0
    %v1733 = vadd.f32 %v1720, %v1732
    %v1734 = vpop.f32.mrf.mxu0
    %1735 = vdwg.mxu0
    %1736 = vmatpush.bf16.msra.mxu0 %v1290
    %1737 = vmatpush.bf16.msra.mxu0 %v1286
    %1738 = vmatpush.bf16.msra.mxu0 %v1282
    %1739 = vmatpush.bf16.msra.mxu0 %v1278
    %1740 = vmatpush.bf16.msra.mxu0 %v1274
    %1741 = vmatpush.bf16.msra.mxu0 %v1270
    %1742 = vmatpush.bf16.msra.mxu0 %v1266
    %1743 = vmatpush.bf16.msra.mxu0 %v1262
    %1744 = vmatmul.bf16.gmra.mxu0 %v416
    %v1745 = vpop.f32.mrf.mxu0
    %v1746 = vadd.f32 %v1733, %v1745
    %v1747 = vpop.f32.mrf.mxu0
    %1748 = vdwg.mxu0
    %1749 = vmatpush.bf16.msra.mxu0 %v1322
    %1750 = vmatpush.bf16.msra.mxu0 %v1318
    %1751 = vmatpush.bf16.msra.mxu0 %v1314
    %1752 = vmatpush.bf16.msra.mxu0 %v1310
    %1753 = vmatpush.bf16.msra.mxu0 %v1306
    %1754 = vmatpush.bf16.msra.mxu0 %v1302
    %1755 = vmatpush.bf16.msra.mxu0 %v1298
    %1756 = vmatpush.bf16.msra.mxu0 %v1294
    %1757 = vmatmul.bf16.gmra.mxu0 %v417
    %v1758 = vpop.f32.mrf.mxu0
    %v1759 = vadd.f32 %v1746, %v1758
    %v1760 = vpop.f32.mrf.mxu0
    %1761 = vdwg.mxu0
    %1762 = vmatpush.bf16.msra.mxu0 %v1354
    %1763 = vmatpush.bf16.msra.mxu0 %v1350
    %1764 = vmatpush.bf16.msra.mxu0 %v1346
    %1765 = vmatpush.bf16.msra.mxu0 %v1342
    %1766 = vmatpush.bf16.msra.mxu0 %v1338
    %1767 = vmatpush.bf16.msra.mxu0 %v1334
    %1768 = vmatpush.bf16.msra.mxu0 %v1330
    %1769 = vmatpush.bf16.msra.mxu0 %v1326
    %1770 = vmatmul.bf16.gmra.mxu0 %v418
    %v1771 = vpop.f32.mrf.mxu0
    %v1772 = vadd.f32 %v1759, %v1771
    %v1773 = vpop.f32.mrf.mxu0
    %1774 = vdwg.mxu0
    %1775 = vmatpush.bf16.msra.mxu0 %v1386
    %1776 = vmatpush.bf16.msra.mxu0 %v1382
    %1777 = vmatpush.bf16.msra.mxu0 %v1378
    %1778 = vmatpush.bf16.msra.mxu0 %v1374
    %1779 = vmatpush.bf16.msra.mxu0 %v1370
    %1780 = vmatpush.bf16.msra.mxu0 %v1366
    %1781 = vmatpush.bf16.msra.mxu0 %v1362
    %1782 = vmatpush.bf16.msra.mxu0 %v1358
    %1783 = vmatmul.bf16.gmra.mxu0 %v419
    %v1784 = vpop.f32.mrf.mxu0
    %v1785 = vadd.f32 %v1772, %v1784
    %v1786 = vpop.f32.mrf.mxu0
    %1787 = vdwg.mxu0
    %1788 = vmatpush.bf16.msra.mxu0 %v1418
    %1789 = vmatpush.bf16.msra.mxu0 %v1414
    %1790 = vmatpush.bf16.msra.mxu0 %v1410
    %1791 = vmatpush.bf16.msra.mxu0 %v1406
    %1792 = vmatpush.bf16.msra.mxu0 %v1402
    %1793 = vmatpush.bf16.msra.mxu0 %v1398
    %1794 = vmatpush.bf16.msra.mxu0 %v1394
    %1795 = vmatpush.bf16.msra.mxu0 %v1390
    %1796 = vmatmul.bf16.gmra.mxu0 %v420
    %v1797 = vpop.f32.mrf.mxu0
    %v1798 = vadd.f32 %v1785, %v1797
    %v1799 = vpop.f32.mrf.mxu0
    %1800 = vdwg.mxu0
    %1801 = vmatpush.bf16.msra.mxu0 %v1450
    %1802 = vmatpush.bf16.msra.mxu0 %v1446
    %1803 = vmatpush.bf16.msra.mxu0 %v1442
    %1804 = vmatpush.bf16.msra.mxu0 %v1438
    %1805 = vmatpush.bf16.msra.mxu0 %v1434
    %1806 = vmatpush.bf16.msra.mxu0 %v1430
    %1807 = vmatpush.bf16.msra.mxu0 %v1426
    %1808 = vmatpush.bf16.msra.mxu0 %v1422
    %1809 = vmatmul.bf16.gmra.mxu0 %v421
    %v1810 = vpop.f32.mrf.mxu0
    %v1811 = vadd.f32 %v1798, %v1810
    %v1812 = vpop.f32.mrf.mxu0
    %1813 = vdwg.mxu0
    %1814 = vmatpush.bf16.msra.mxu0 %v1227
    %1815 = vmatpush.bf16.msra.mxu0 %v1223
    %1816 = vmatpush.bf16.msra.mxu0 %v1219
    %1817 = vmatpush.bf16.msra.mxu0 %v1215
    %1818 = vmatpush.bf16.msra.mxu0 %v1211
    %1819 = vmatpush.bf16.msra.mxu0 %v1207
    %1820 = vmatpush.bf16.msra.mxu0 %v1203
    %1821 = vmatpush.bf16.msra.mxu0 %v1199
    %1822 = vmatmul.bf16.gmra.mxu0 %v414
    %v1823 = vpop.f32.mrf.mxu0
    %v1824 = vadd.f32 0.0, %v1823
    %v1825 = vpop.f32.mrf.mxu0
    %1826 = vdwg.mxu0
    %1827 = vmatpush.bf16.msra.mxu0 %v1259
    %1828 = vmatpush.bf16.msra.mxu0 %v1255
    %1829 = vmatpush.bf16.msra.mxu0 %v1251
    %1830 = vmatpush.bf16.msra.mxu0 %v1247
    %1831 = vmatpush.bf16.msra.mxu0 %v1243
    %1832 = vmatpush.bf16.msra.mxu0 %v1239
    %1833 = vmatpush.bf16.msra.mxu0 %v1235
    %1834 = vmatpush.bf16.msra.mxu0 %v1231
    %1835 = vmatmul.bf16.gmra.mxu0 %v415
    %v1836 = vpop.f32.mrf.mxu0
    %v1837 = vadd.f32 %v1824, %v1836
    %v1838 = vpop.f32.mrf.mxu0
    %1839 = vdwg.mxu0
    %1840 = vmatpush.bf16.msra.mxu0 %v1291
    %1841 = vmatpush.bf16.msra.mxu0 %v1287
    %1842 = vmatpush.bf16.msra.mxu0 %v1283
    %1843 = vmatpush.bf16.msra.mxu0 %v1279
    %1844 = vmatpush.bf16.msra.mxu0 %v1275
    %1845 = vmatpush.bf16.msra.mxu0 %v1271
    %1846 = vmatpush.bf16.msra.mxu0 %v1267
    %1847 = vmatpush.bf16.msra.mxu0 %v1263
    %1848 = vmatmul.bf16.gmra.mxu0 %v416
    %v1849 = vpop.f32.mrf.mxu0
    %v1850 = vadd.f32 %v1837, %v1849
    %v1851 = vpop.f32.mrf.mxu0
    %1852 = vdwg.mxu0
    %1853 = vmatpush.bf16.msra.mxu0 %v1323
    %1854 = vmatpush.bf16.msra.mxu0 %v1319
    %1855 = vmatpush.bf16.msra.mxu0 %v1315
    %1856 = vmatpush.bf16.msra.mxu0 %v1311
    %1857 = vmatpush.bf16.msra.mxu0 %v1307
    %1858 = vmatpush.bf16.msra.mxu0 %v1303
    %1859 = vmatpush.bf16.msra.mxu0 %v1299
    %1860 = vmatpush.bf16.msra.mxu0 %v1295
    %1861 = vmatmul.bf16.gmra.mxu0 %v417
    %v1862 = vpop.f32.mrf.mxu0
    %v1863 = vadd.f32 %v1850, %v1862
    %v1864 = vpop.f32.mrf.mxu0
    %1865 = vdwg.mxu0
    %1866 = vmatpush.bf16.msra.mxu0 %v1355
    %1867 = vmatpush.bf16.msra.mxu0 %v1351
    %1868 = vmatpush.bf16.msra.mxu0 %v1347
    %1869 = vmatpush.bf16.msra.mxu0 %v1343
    %1870 = vmatpush.bf16.msra.mxu0 %v1339
    %1871 = vmatpush.bf16.msra.mxu0 %v1335
    %1872 = vmatpush.bf16.msra.mxu0 %v1331
    %1873 = vmatpush.bf16.msra.mxu0 %v1327
    %1874 = vmatmul.bf16.gmra.mxu0 %v418
    %v1875 = vpop.f32.mrf.mxu0
    %v1876 = vadd.f32 %v1863, %v1875
    %v1877 = vpop.f32.mrf.mxu0
    %1878 = vdwg.mxu0
    %1879 = vmatpush.bf16.msra.mxu0 %v1387
    %1880 = vmatpush.bf16.msra.mxu0 %v1383
    %1881 = vmatpush.bf16.msra.mxu0 %v1379
    %1882 = vmatpush.bf16.msra.mxu0 %v1375
    %1883 = vmatpush.bf16.msra.mxu0 %v1371
    %1884 = vmatpush.bf16.msra.mxu0 %v1367
    %1885 = vmatpush.bf16.msra.mxu0 %v1363
    %1886 = vmatpush.bf16.msra.mxu0 %v1359
    %1887 = vmatmul.bf16.gmra.mxu0 %v419
    %v1888 = vpop.f32.mrf.mxu0
    %v1889 = vadd.f32 %v1876, %v1888
    %v1890 = vpop.f32.mrf.mxu0
    %1891 = vdwg.mxu0
    %1892 = vmatpush.bf16.msra.mxu0 %v1419
    %1893 = vmatpush.bf16.msra.mxu0 %v1415
    %1894 = vmatpush.bf16.msra.mxu0 %v1411
    %1895 = vmatpush.bf16.msra.mxu0 %v1407
    %1896 = vmatpush.bf16.msra.mxu0 %v1403
    %1897 = vmatpush.bf16.msra.mxu0 %v1399
    %1898 = vmatpush.bf16.msra.mxu0 %v1395
    %1899 = vmatpush.bf16.msra.mxu0 %v1391
    %1900 = vmatmul.bf16.gmra.mxu0 %v420
    %v1901 = vpop.f32.mrf.mxu0
    %v1902 = vadd.f32 %v1889, %v1901
    %v1903 = vpop.f32.mrf.mxu0
    %1904 = vdwg.mxu0
    %1905 = vmatpush.bf16.msra.mxu0 %v1451
    %1906 = vmatpush.bf16.msra.mxu0 %v1447
    %1907 = vmatpush.bf16.msra.mxu0 %v1443
    %1908 = vmatpush.bf16.msra.mxu0 %v1439
    %1909 = vmatpush.bf16.msra.mxu0 %v1435
    %1910 = vmatpush.bf16.msra.mxu0 %v1431
    %1911 = vmatpush.bf16.msra.mxu0 %v1427
    %1912 = vmatpush.bf16.msra.mxu0 %v1423
    %1913 = vmatmul.bf16.gmra.mxu0 %v421
    %v1914 = vpop.f32.mrf.mxu0
    %v1915 = vadd.f32 %v1902, %v1914
    %v1916 = vpop.f32.mrf.mxu0
    %1917 = vdwg.mxu0
    %1918 = vmatpush.bf16.msra.mxu0 %v1228
    %1919 = vmatpush.bf16.msra.mxu0 %v1224
    %1920 = vmatpush.bf16.msra.mxu0 %v1220
    %1921 = vmatpush.bf16.msra.mxu0 %v1216
    %1922 = vmatpush.bf16.msra.mxu0 %v1212
    %1923 = vmatpush.bf16.msra.mxu0 %v1208
    %1924 = vmatpush.bf16.msra.mxu0 %v1204
    %1925 = vmatpush.bf16.msra.mxu0 %v1200
    %1926 = vmatmul.bf16.gmra.mxu0 %v414
    %v1927 = vpop.f32.mrf.mxu0
    %v1928 = vadd.f32 0.0, %v1927
    %v1929 = vpop.f32.mrf.mxu0
    %1930 = vdwg.mxu0
    %1931 = vmatpush.bf16.msra.mxu0 %v1260
    %1932 = vmatpush.bf16.msra.mxu0 %v1256
    %1933 = vmatpush.bf16.msra.mxu0 %v1252
    %1934 = vmatpush.bf16.msra.mxu0 %v1248
    %1935 = vmatpush.bf16.msra.mxu0 %v1244
    %1936 = vmatpush.bf16.msra.mxu0 %v1240
    %1937 = vmatpush.bf16.msra.mxu0 %v1236
    %1938 = vmatpush.bf16.msra.mxu0 %v1232
    %1939 = vmatmul.bf16.gmra.mxu0 %v415
    %v1940 = vpop.f32.mrf.mxu0
    %v1941 = vadd.f32 %v1928, %v1940
    %v1942 = vpop.f32.mrf.mxu0
    %1943 = vdwg.mxu0
    %1944 = vmatpush.bf16.msra.mxu0 %v1292
    %1945 = vmatpush.bf16.msra.mxu0 %v1288
    %1946 = vmatpush.bf16.msra.mxu0 %v1284
    %1947 = vmatpush.bf16.msra.mxu0 %v1280
    %1948 = vmatpush.bf16.msra.mxu0 %v1276
    %1949 = vmatpush.bf16.msra.mxu0 %v1272
    %1950 = vmatpush.bf16.msra.mxu0 %v1268
    %1951 = vmatpush.bf16.msra.mxu0 %v1264
    %1952 = vmatmul.bf16.gmra.mxu0 %v416
    %v1953 = vpop.f32.mrf.mxu0
    %v1954 = vadd.f32 %v1941, %v1953
    %v1955 = vpop.f32.mrf.mxu0
    %1956 = vdwg.mxu0
    %1957 = vmatpush.bf16.msra.mxu0 %v1324
    %1958 = vmatpush.bf16.msra.mxu0 %v1320
    %1959 = vmatpush.bf16.msra.mxu0 %v1316
    %1960 = vmatpush.bf16.msra.mxu0 %v1312
    %1961 = vmatpush.bf16.msra.mxu0 %v1308
    %1962 = vmatpush.bf16.msra.mxu0 %v1304
    %1963 = vmatpush.bf16.msra.mxu0 %v1300
    %1964 = vmatpush.bf16.msra.mxu0 %v1296
    %1965 = vmatmul.bf16.gmra.mxu0 %v417
    %v1966 = vpop.f32.mrf.mxu0
    %v1967 = vadd.f32 %v1954, %v1966
    %v1968 = vpop.f32.mrf.mxu0
    %1969 = vdwg.mxu0
    %1970 = vmatpush.bf16.msra.mxu0 %v1356
    %1971 = vmatpush.bf16.msra.mxu0 %v1352
    %1972 = vmatpush.bf16.msra.mxu0 %v1348
    %1973 = vmatpush.bf16.msra.mxu0 %v1344
    %1974 = vmatpush.bf16.msra.mxu0 %v1340
    %1975 = vmatpush.bf16.msra.mxu0 %v1336
    %1976 = vmatpush.bf16.msra.mxu0 %v1332
    %1977 = vmatpush.bf16.msra.mxu0 %v1328
    %1978 = vmatmul.bf16.gmra.mxu0 %v418
    %v1979 = vpop.f32.mrf.mxu0
    %v1980 = vadd.f32 %v1967, %v1979
    %v1981 = vpop.f32.mrf.mxu0
    %1982 = vdwg.mxu0
    %1983 = vmatpush.bf16.msra.mxu0 %v1388
    %1984 = vmatpush.bf16.msra.mxu0 %v1384
    %1985 = vmatpush.bf16.msra.mxu0 %v1380
    %1986 = vmatpush.bf16.msra.mxu0 %v1376
    %1987 = vmatpush.bf16.msra.mxu0 %v1372
    %1988 = vmatpush.bf16.msra.mxu0 %v1368
    %1989 = vmatpush.bf16.msra.mxu0 %v1364
    %1990 = vmatpush.bf16.msra.mxu0 %v1360
    %1991 = vmatmul.bf16.gmra.mxu0 %v419
    %v1992 = vpop.f32.mrf.mxu0
    %v1993 = vadd.f32 %v1980, %v1992
    %v1994 = vpop.f32.mrf.mxu0
    %1995 = vdwg.mxu0
    %1996 = vmatpush.bf16.msra.mxu0 %v1420
    %1997 = vmatpush.bf16.msra.mxu0 %v1416
    %1998 = vmatpush.bf16.msra.mxu0 %v1412
    %1999 = vmatpush.bf16.msra.mxu0 %v1408
    %2000 = vmatpush.bf16.msra.mxu0 %v1404
    %2001 = vmatpush.bf16.msra.mxu0 %v1400
    %2002 = vmatpush.bf16.msra.mxu0 %v1396
    %2003 = vmatpush.bf16.msra.mxu0 %v1392
    %2004 = vmatmul.bf16.gmra.mxu0 %v420
    %v2005 = vpop.f32.mrf.mxu0
    %v2006 = vadd.f32 %v1993, %v2005
    %v2007 = vpop.f32.mrf.mxu0
    %2008 = vdwg.mxu0
    %2009 = vmatpush.bf16.msra.mxu0 %v1452
    %2010 = vmatpush.bf16.msra.mxu0 %v1448
    %2011 = vmatpush.bf16.msra.mxu0 %v1444
    %2012 = vmatpush.bf16.msra.mxu0 %v1440
    %2013 = vmatpush.bf16.msra.mxu0 %v1436
    %2014 = vmatpush.bf16.msra.mxu0 %v1432
    %2015 = vmatpush.bf16.msra.mxu0 %v1428
    %2016 = vmatpush.bf16.msra.mxu0 %v1424
    %2017 = vmatmul.bf16.gmra.mxu0 %v421
    %v2018 = vpop.f32.mrf.mxu0
    %v2019 = vadd.f32 %v2006, %v2018
    %v2020 = vpop.f32.mrf.mxu0
    %2021 = vdwg.mxu0
    %2022 = vmatpush.bf16.msra.mxu0 %v1229
    %2023 = vmatpush.bf16.msra.mxu0 %v1225
    %2024 = vmatpush.bf16.msra.mxu0 %v1221
    %2025 = vmatpush.bf16.msra.mxu0 %v1217
    %2026 = vmatpush.bf16.msra.mxu0 %v1213
    %2027 = vmatpush.bf16.msra.mxu0 %v1209
    %2028 = vmatpush.bf16.msra.mxu0 %v1205
    %2029 = vmatpush.bf16.msra.mxu0 %v1201
    %2030 = vmatmul.bf16.gmra.mxu0 %v414
    %v2031 = vpop.f32.mrf.mxu0
    %v2032 = vadd.f32 0.0, %v2031
    %v2033 = vpop.f32.mrf.mxu0
    %2034 = vdwg.mxu0
    %2035 = vmatpush.bf16.msra.mxu0 %v1261
    %2036 = vmatpush.bf16.msra.mxu0 %v1257
    %2037 = vmatpush.bf16.msra.mxu0 %v1253
    %2038 = vmatpush.bf16.msra.mxu0 %v1249
    %2039 = vmatpush.bf16.msra.mxu0 %v1245
    %2040 = vmatpush.bf16.msra.mxu0 %v1241
    %2041 = vmatpush.bf16.msra.mxu0 %v1237
    %2042 = vmatpush.bf16.msra.mxu0 %v1233
    %2043 = vmatmul.bf16.gmra.mxu0 %v415
    %v2044 = vpop.f32.mrf.mxu0
    %v2045 = vadd.f32 %v2032, %v2044
    %v2046 = vpop.f32.mrf.mxu0
    %2047 = vdwg.mxu0
    %2048 = vmatpush.bf16.msra.mxu0 %v1293
    %2049 = vmatpush.bf16.msra.mxu0 %v1289
    %2050 = vmatpush.bf16.msra.mxu0 %v1285
    %2051 = vmatpush.bf16.msra.mxu0 %v1281
    %2052 = vmatpush.bf16.msra.mxu0 %v1277
    %2053 = vmatpush.bf16.msra.mxu0 %v1273
    %2054 = vmatpush.bf16.msra.mxu0 %v1269
    %2055 = vmatpush.bf16.msra.mxu0 %v1265
    %2056 = vmatmul.bf16.gmra.mxu0 %v416
    %v2057 = vpop.f32.mrf.mxu0
    %v2058 = vadd.f32 %v2045, %v2057
    %v2059 = vpop.f32.mrf.mxu0
    %2060 = vdwg.mxu0
    %2061 = vmatpush.bf16.msra.mxu0 %v1325
    %2062 = vmatpush.bf16.msra.mxu0 %v1321
    %2063 = vmatpush.bf16.msra.mxu0 %v1317
    %2064 = vmatpush.bf16.msra.mxu0 %v1313
    %2065 = vmatpush.bf16.msra.mxu0 %v1309
    %2066 = vmatpush.bf16.msra.mxu0 %v1305
    %2067 = vmatpush.bf16.msra.mxu0 %v1301
    %2068 = vmatpush.bf16.msra.mxu0 %v1297
    %2069 = vmatmul.bf16.gmra.mxu0 %v417
    %v2070 = vpop.f32.mrf.mxu0
    %v2071 = vadd.f32 %v2058, %v2070
    %v2072 = vpop.f32.mrf.mxu0
    %2073 = vdwg.mxu0
    %2074 = vmatpush.bf16.msra.mxu0 %v1357
    %2075 = vmatpush.bf16.msra.mxu0 %v1353
    %2076 = vmatpush.bf16.msra.mxu0 %v1349
    %2077 = vmatpush.bf16.msra.mxu0 %v1345
    %2078 = vmatpush.bf16.msra.mxu0 %v1341
    %2079 = vmatpush.bf16.msra.mxu0 %v1337
    %2080 = vmatpush.bf16.msra.mxu0 %v1333
    %2081 = vmatpush.bf16.msra.mxu0 %v1329
    %2082 = vmatmul.bf16.gmra.mxu0 %v418
    %v2083 = vpop.f32.mrf.mxu0
    %v2084 = vadd.f32 %v2071, %v2083
    %v2085 = vpop.f32.mrf.mxu0
    %2086 = vdwg.mxu0
    %2087 = vmatpush.bf16.msra.mxu0 %v1389
    %2088 = vmatpush.bf16.msra.mxu0 %v1385
    %2089 = vmatpush.bf16.msra.mxu0 %v1381
    %2090 = vmatpush.bf16.msra.mxu0 %v1377
    %2091 = vmatpush.bf16.msra.mxu0 %v1373
    %2092 = vmatpush.bf16.msra.mxu0 %v1369
    %2093 = vmatpush.bf16.msra.mxu0 %v1365
    %2094 = vmatpush.bf16.msra.mxu0 %v1361
    %2095 = vmatmul.bf16.gmra.mxu0 %v419
    %v2096 = vpop.f32.mrf.mxu0
    %v2097 = vadd.f32 %v2084, %v2096
    %v2098 = vpop.f32.mrf.mxu0
    %2099 = vdwg.mxu0
    %2100 = vmatpush.bf16.msra.mxu0 %v1421
    %2101 = vmatpush.bf16.msra.mxu0 %v1417
    %2102 = vmatpush.bf16.msra.mxu0 %v1413
    %2103 = vmatpush.bf16.msra.mxu0 %v1409
    %2104 = vmatpush.bf16.msra.mxu0 %v1405
    %2105 = vmatpush.bf16.msra.mxu0 %v1401
    %2106 = vmatpush.bf16.msra.mxu0 %v1397
    %2107 = vmatpush.bf16.msra.mxu0 %v1393
    %2108 = vmatmul.bf16.gmra.mxu0 %v420
    %v2109 = vpop.f32.mrf.mxu0
    %v2110 = vadd.f32 %v2097, %v2109
    %v2111 = vpop.f32.mrf.mxu0
    %2112 = vdwg.mxu0
    %2113 = vmatpush.bf16.msra.mxu0 %v1453
    %2114 = vmatpush.bf16.msra.mxu0 %v1449
    %2115 = vmatpush.bf16.msra.mxu0 %v1445
    %2116 = vmatpush.bf16.msra.mxu0 %v1441
    %2117 = vmatpush.bf16.msra.mxu0 %v1437
    %2118 = vmatpush.bf16.msra.mxu0 %v1433
    %2119 = vmatpush.bf16.msra.mxu0 %v1429
    %2120 = vmatpush.bf16.msra.mxu0 %v1425
    %2121 = vmatmul.bf16.gmra.mxu0 %v421
    %v2122 = vpop.f32.mrf.mxu0
    %v2123 = vadd.f32 %v2110, %v2122
    %v2124 = vpop.f32.mrf.mxu0
    %2125 = vdwg.mxu0
    %v2126 = vld [vmem:[#allocation7] sm:$0xf]
    %v2127 = vld [vmem:[#allocation8] sm:$0xf]
    %2128 = vadd.xlane.f32.xlu0 %v1811
    %v2129 = vpop.xlane.xlu0 %2128
    %v2130 = vmul.f32 %v2129, 0.0078125
    %v2131 = vsub.f32 %v1811, %v2130
    %v2132 = vmul.f32 %v2131, %v2131
    %2133 = vadd.xlane.f32.xlu0 %v2132
    %v2134 = vpop.xlane.xlu0 %2133
    %v2135 = vmul.f32 %v2134, 0.0078125
    %v2136 = vmax.f32 %v2135, 0.0
    %v2137 = vadd.f32 %v2136, 1e-05
    %v2138 = vrsqrt.pop %v2137
    %v2139 = vmul.f32 %v2138, %v2137
    %v2140 = vmul.f32 %v2139, %v2138
    %v2141 = vmul.f32 0.5, %v2140
    %v2142 = vsub.f32 1.5, %v2141
    %v2143 = vmul.f32 %v2138, %v2142
    %vm2144 = vweird.f32 %v2137
    %vm2145 = vweird.f32 %v2138
    %vm2146 = vmor %vm2144, %vm2145
    %v2147 = vsel %vm2146, %v2138, %v2143
    %v2148 = vmul.f32 %v2131, %v2147
    %2149 = vadd.xlane.f32.xlu0 %v1915
    %v2150 = vpop.xlane.xlu0 %2149
    %v2151 = vmul.f32 %v2150, 0.0078125
    %v2152 = vsub.f32 %v1915, %v2151
    %v2153 = vmul.f32 %v2152, %v2152
    %2154 = vadd.xlane.f32.xlu0 %v2153
    %v2155 = vpop.xlane.xlu0 %2154
    %v2156 = vmul.f32 %v2155, 0.0078125
    %v2157 = vmax.f32 %v2156, 0.0
    %v2158 = vadd.f32 %v2157, 1e-05
    %v2159 = vrsqrt.pop %v2158
    %v2160 = vmul.f32 %v2159, %v2158
    %v2161 = vmul.f32 %v2160, %v2159
    %v2162 = vmul.f32 0.5, %v2161
    %v2163 = vsub.f32 1.5, %v2162
    %v2164 = vmul.f32 %v2159, %v2163
    %vm2165 = vweird.f32 %v2158
    %vm2166 = vweird.f32 %v2159
    %vm2167 = vmor %vm2165, %vm2166
    %v2168 = vsel %vm2167, %v2159, %v2164
    %v2169 = vmul.f32 %v2152, %v2168
    %2170 = vadd.xlane.f32.xlu0 %v2019
    %v2171 = vpop.xlane.xlu0 %2170
    %v2172 = vmul.f32 %v2171, 0.0078125
    %v2173 = vsub.f32 %v2019, %v2172
    %v2174 = vmul.f32 %v2173, %v2173
    %2175 = vadd.xlane.f32.xlu0 %v2174
    %v2176 = vpop.xlane.xlu0 %2175
    %v2177 = vmul.f32 %v2176, 0.0078125
    %v2178 = vmax.f32 %v2177, 0.0
    %v2179 = vadd.f32 %v2178, 1e-05
    %v2180 = vrsqrt.pop %v2179
    %v2181 = vmul.f32 %v2180, %v2179
    %v2182 = vmul.f32 %v2181, %v2180
    %v2183 = vmul.f32 0.5, %v2182
    %v2184 = vsub.f32 1.5, %v2183
    %v2185 = vmul.f32 %v2180, %v2184
    %vm2186 = vweird.f32 %v2179
    %vm2187 = vweird.f32 %v2180
    %vm2188 = vmor %vm2186, %vm2187
    %v2189 = vsel %vm2188, %v2180, %v2185
    %v2190 = vmul.f32 %v2173, %v2189
    %2191 = vadd.xlane.f32.xlu0 %v2123
    %v2192 = vpop.xlane.xlu0 %2191
    %v2193 = vmul.f32 %v2192, 0.0078125
    %v2194 = vsub.f32 %v2123, %v2193
    %v2195 = vmul.f32 %v2194, %v2194
    %2196 = vadd.xlane.f32.xlu0 %v2195
    %v2197 = vpop.xlane.xlu0 %2196
    %v2198 = vmul.f32 %v2197, 0.0078125
    %v2199 = vmax.f32 %v2198, 0.0
    %v2200 = vadd.f32 %v2199, 1e-05
    %v2201 = vrsqrt.pop %v2200
    %v2202 = vmul.f32 %v2201, %v2200
    %v2203 = vmul.f32 %v2202, %v2201
    %v2204 = vmul.f32 0.5, %v2203
    %v2205 = vsub.f32 1.5, %v2204
    %v2206 = vmul.f32 %v2201, %v2205
    %vm2207 = vweird.f32 %v2200
    %vm2208 = vweird.f32 %v2201
    %vm2209 = vmor %vm2207, %vm2208
    %v2210 = vsel %vm2209, %v2201, %v2206
    %v2211 = vmul.f32 %v2194, %v2210
    %v2213 = vperm.slane %v2126, 0
    %v2214 = vperm.slane %v2126, 1
    %v2215 = vperm.slane %v2126, 2
    %v2216 = vperm.slane %v2126, 3
    %v2221 = vmul.f32 %v2148, %v2213
    %v2222 = vmul.f32 %v2169, %v2214
    %v2223 = vmul.f32 %v2190, %v2215
    %v2224 = vmul.f32 %v2211, %v2216
    %v2226 = vperm.slane %v2127, 0
    %v2227 = vperm.slane %v2127, 1
    %v2228 = vperm.slane %v2127, 2
    %v2229 = vperm.slane %v2127, 3
    %v2234 = vadd.f32 %v2221, %v2226
    %v2235 = vadd.f32 %v2222, %v2227
    %v2236 = vadd.f32 %v2223, %v2228
    %v2237 = vadd.f32 %v2224, %v2229
    %v2238 = vmax.f32 %v2234, 0.0
    %v2239 = vmax.f32 %v2235, 0.0
    %v2240 = vmax.f32 %v2236, 0.0
    %v2241 = vmax.f32 %v2237, 0.0
    %v2242 = vpack.c.bf16 %v2238, %v2238
    %v2243 = vpack.c.bf16 %v2239, %v2239
    %v2244 = vpack.c.bf16 %v2240, %v2240
    %v2245 = vpack.c.bf16 %v2241, %v2241
    %v2246 = vld [vmem:[#allocation10] sm:$0xff]
    %v2247 = vld [vmem:[#allocation10 + $0x8] sm:$0xff]
    %v2248 = vld [vmem:[#allocation10 + $0x10] sm:$0xff]
    %v2249 = vld [vmem:[#allocation10 + $0x18] sm:$0xff]
    %v2250 = vld [vmem:[#allocation10 + $0x20] sm:$0xff]
    %v2251 = vld [vmem:[#allocation10 + $0x28] sm:$0xff]
    %v2252 = vld [vmem:[#allocation10 + $0x30] sm:$0xff]
    %v2253 = vld [vmem:[#allocation10 + $0x38] sm:$0xff]
    %v2254 = vld [vmem:[#allocation10 + $0x40] sm:$0xff]
    %v2255 = vld [vmem:[#allocation10 + $0x48] sm:$0xff]
    %v2256 = vld [vmem:[#allocation10 + $0x50] sm:$0xff]
    %v2257 = vld [vmem:[#allocation10 + $0x58] sm:$0xff]
    %v2258 = vld [vmem:[#allocation10 + $0x60] sm:$0xff]
    %v2259 = vld [vmem:[#allocation10 + $0x68] sm:$0xff]
    %v2260 = vld [vmem:[#allocation10 + $0x70] sm:$0xff]
    %v2261 = vld [vmem:[#allocation10 + $0x78] sm:$0xff]
    %v2262 = vld [vmem:[#allocation10 + $0x80] sm:$0xff]
    %v2263 = vld [vmem:[#allocation10 + $0x88] sm:$0xff]
    %v2264 = vld [vmem:[#allocation10 + $0x90] sm:$0xff]
    %v2265 = vld [vmem:[#allocation10 + $0x98] sm:$0xff]
    %v2266 = vld [vmem:[#allocation10 + $0xa0] sm:$0xff]
    %v2267 = vld [vmem:[#allocation10 + $0xa8] sm:$0xff]
    %v2268 = vld [vmem:[#allocation10 + $0xb0] sm:$0xff]
    %v2269 = vld [vmem:[#allocation10 + $0xb8] sm:$0xff]
    %v2270 = vld [vmem:[#allocation10 + $0xc0] sm:$0xff]
    %v2271 = vld [vmem:[#allocation10 + $0xc8] sm:$0xff]
    %v2272 = vld [vmem:[#allocation10 + $0xd0] sm:$0xff]
    %v2273 = vld [vmem:[#allocation10 + $0xd8] sm:$0xff]
    %v2274 = vld [vmem:[#allocation10 + $0xe0] sm:$0xff]
    %v2275 = vld [vmem:[#allocation10 + $0xe8] sm:$0xff]
    %v2276 = vld [vmem:[#allocation10 + $0xf0] sm:$0xff]
    %v2277 = vld [vmem:[#allocation10 + $0xf8] sm:$0xff]
    %v2278 = vld [vmem:[#allocation10 + $0x100] sm:$0xff]
    %v2279 = vld [vmem:[#allocation10 + $0x108] sm:$0xff]
    %v2280 = vld [vmem:[#allocation10 + $0x110] sm:$0xff]
    %v2281 = vld [vmem:[#allocation10 + $0x118] sm:$0xff]
    %v2282 = vld [vmem:[#allocation10 + $0x120] sm:$0xff]
    %v2283 = vld [vmem:[#allocation10 + $0x128] sm:$0xff]
    %v2284 = vld [vmem:[#allocation10 + $0x130] sm:$0xff]
    %v2285 = vld [vmem:[#allocation10 + $0x138] sm:$0xff]
    %v2286 = vld [vmem:[#allocation10 + $0x140] sm:$0xff]
    %v2287 = vld [vmem:[#allocation10 + $0x148] sm:$0xff]
    %v2288 = vld [vmem:[#allocation10 + $0x150] sm:$0xff]
    %v2289 = vld [vmem:[#allocation10 + $0x158] sm:$0xff]
    %v2290 = vld [vmem:[#allocation10 + $0x160] sm:$0xff]
    %v2291 = vld [vmem:[#allocation10 + $0x168] sm:$0xff]
    %v2292 = vld [vmem:[#allocation10 + $0x170] sm:$0xff]
    %v2293 = vld [vmem:[#allocation10 + $0x178] sm:$0xff]
    %v2294 = vld [vmem:[#allocation10 + $0x180] sm:$0xff]
    %v2295 = vld [vmem:[#allocation10 + $0x188] sm:$0xff]
    %v2296 = vld [vmem:[#allocation10 + $0x190] sm:$0xff]
    %v2297 = vld [vmem:[#allocation10 + $0x198] sm:$0xff]
    %v2298 = vld [vmem:[#allocation10 + $0x1a0] sm:$0xff]
    %v2299 = vld [vmem:[#allocation10 + $0x1a8] sm:$0xff]
    %v2300 = vld [vmem:[#allocation10 + $0x1b0] sm:$0xff]
    %v2301 = vld [vmem:[#allocation10 + $0x1b8] sm:$0xff]
    %v2302 = vld [vmem:[#allocation10 + $0x1c0] sm:$0xff]
    %v2303 = vld [vmem:[#allocation10 + $0x1c8] sm:$0xff]
    %v2304 = vld [vmem:[#allocation10 + $0x1d0] sm:$0xff]
    %v2305 = vld [vmem:[#allocation10 + $0x1d8] sm:$0xff]
    %v2306 = vld [vmem:[#allocation10 + $0x1e0] sm:$0xff]
    %v2307 = vld [vmem:[#allocation10 + $0x1e8] sm:$0xff]
    %v2308 = vld [vmem:[#allocation10 + $0x1f0] sm:$0xff]
    %v2309 = vld [vmem:[#allocation10 + $0x1f8] sm:$0xff]
    %v2374 = vunpack.c.l.b16 %v2246
    %v2375 = vunpack.c.h.b16 %v2246
    %v2376 = vunpack.c.l.b16 %v2247
    %v2377 = vunpack.c.h.b16 %v2247
    %v2378 = vunpack.c.l.b16 %v2248
    %v2379 = vunpack.c.h.b16 %v2248
    %v2380 = vunpack.c.l.b16 %v2249
    %v2381 = vunpack.c.h.b16 %v2249
    %v2382 = vunpack.c.l.b16 %v2250
    %v2383 = vunpack.c.h.b16 %v2250
    %v2384 = vunpack.c.l.b16 %v2251
    %v2385 = vunpack.c.h.b16 %v2251
    %v2386 = vunpack.c.l.b16 %v2252
    %v2387 = vunpack.c.h.b16 %v2252
    %v2388 = vunpack.c.l.b16 %v2253
    %v2389 = vunpack.c.h.b16 %v2253
    %v2390 = vunpack.c.l.b16 %v2254
    %v2391 = vunpack.c.h.b16 %v2254
    %v2392 = vunpack.c.l.b16 %v2255
    %v2393 = vunpack.c.h.b16 %v2255
    %v2394 = vunpack.c.l.b16 %v2256
    %v2395 = vunpack.c.h.b16 %v2256
    %v2396 = vunpack.c.l.b16 %v2257
    %v2397 = vunpack.c.h.b16 %v2257
    %v2398 = vunpack.c.l.b16 %v2258
    %v2399 = vunpack.c.h.b16 %v2258
    %v2400 = vunpack.c.l.b16 %v2259
    %v2401 = vunpack.c.h.b16 %v2259
    %v2402 = vunpack.c.l.b16 %v2260
    %v2403 = vunpack.c.h.b16 %v2260
    %v2404 = vunpack.c.l.b16 %v2261
    %v2405 = vunpack.c.h.b16 %v2261
    %v2406 = vunpack.c.l.b16 %v2262
    %v2407 = vunpack.c.h.b16 %v2262
    %v2408 = vunpack.c.l.b16 %v2263
    %v2409 = vunpack.c.h.b16 %v2263
    %v2410 = vunpack.c.l.b16 %v2264
    %v2411 = vunpack.c.h.b16 %v2264
    %v2412 = vunpack.c.l.b16 %v2265
    %v2413 = vunpack.c.h.b16 %v2265
    %v2414 = vunpack.c.l.b16 %v2266
    %v2415 = vunpack.c.h.b16 %v2266
    %v2416 = vunpack.c.l.b16 %v2267
    %v2417 = vunpack.c.h.b16 %v2267
    %v2418 = vunpack.c.l.b16 %v2268
    %v2419 = vunpack.c.h.b16 %v2268
    %v2420 = vunpack.c.l.b16 %v2269
    %v2421 = vunpack.c.h.b16 %v2269
    %v2422 = vunpack.c.l.b16 %v2270
    %v2423 = vunpack.c.h.b16 %v2270
    %v2424 = vunpack.c.l.b16 %v2271
    %v2425 = vunpack.c.h.b16 %v2271
    %v2426 = vunpack.c.l.b16 %v2272
    %v2427 = vunpack.c.h.b16 %v2272
    %v2428 = vunpack.c.l.b16 %v2273
    %v2429 = vunpack.c.h.b16 %v2273
    %v2430 = vunpack.c.l.b16 %v2274
    %v2431 = vunpack.c.h.b16 %v2274
    %v2432 = vunpack.c.l.b16 %v2275
    %v2433 = vunpack.c.h.b16 %v2275
    %v2434 = vunpack.c.l.b16 %v2276
    %v2435 = vunpack.c.h.b16 %v2276
    %v2436 = vunpack.c.l.b16 %v2277
    %v2437 = vunpack.c.h.b16 %v2277
    %v2438 = vunpack.c.l.b16 %v2278
    %v2439 = vunpack.c.h.b16 %v2278
    %v2440 = vunpack.c.l.b16 %v2279
    %v2441 = vunpack.c.h.b16 %v2279
    %v2442 = vunpack.c.l.b16 %v2280
    %v2443 = vunpack.c.h.b16 %v2280
    %v2444 = vunpack.c.l.b16 %v2281
    %v2445 = vunpack.c.h.b16 %v2281
    %v2446 = vunpack.c.l.b16 %v2282
    %v2447 = vunpack.c.h.b16 %v2282
    %v2448 = vunpack.c.l.b16 %v2283
    %v2449 = vunpack.c.h.b16 %v2283
    %v2450 = vunpack.c.l.b16 %v2284
    %v2451 = vunpack.c.h.b16 %v2284
    %v2452 = vunpack.c.l.b16 %v2285
    %v2453 = vunpack.c.h.b16 %v2285
    %v2454 = vunpack.c.l.b16 %v2286
    %v2455 = vunpack.c.h.b16 %v2286
    %v2456 = vunpack.c.l.b16 %v2287
    %v2457 = vunpack.c.h.b16 %v2287
    %v2458 = vunpack.c.l.b16 %v2288
    %v2459 = vunpack.c.h.b16 %v2288
    %v2460 = vunpack.c.l.b16 %v2289
    %v2461 = vunpack.c.h.b16 %v2289
    %v2462 = vunpack.c.l.b16 %v2290
    %v2463 = vunpack.c.h.b16 %v2290
    %v2464 = vunpack.c.l.b16 %v2291
    %v2465 = vunpack.c.h.b16 %v2291
    %v2466 = vunpack.c.l.b16 %v2292
    %v2467 = vunpack.c.h.b16 %v2292
    %v2468 = vunpack.c.l.b16 %v2293
    %v2469 = vunpack.c.h.b16 %v2293
    %v2470 = vunpack.c.l.b16 %v2294
    %v2471 = vunpack.c.h.b16 %v2294
    %v2472 = vunpack.c.l.b16 %v2295
    %v2473 = vunpack.c.h.b16 %v2295
    %v2474 = vunpack.c.l.b16 %v2296
    %v2475 = vunpack.c.h.b16 %v2296
    %v2476 = vunpack.c.l.b16 %v2297
    %v2477 = vunpack.c.h.b16 %v2297
    %v2478 = vunpack.c.l.b16 %v2298
    %v2479 = vunpack.c.h.b16 %v2298
    %v2480 = vunpack.c.l.b16 %v2299
    %v2481 = vunpack.c.h.b16 %v2299
    %v2482 = vunpack.c.l.b16 %v2300
    %v2483 = vunpack.c.h.b16 %v2300
    %v2484 = vunpack.c.l.b16 %v2301
    %v2485 = vunpack.c.h.b16 %v2301
    %v2486 = vunpack.c.l.b16 %v2302
    %v2487 = vunpack.c.h.b16 %v2302
    %v2488 = vunpack.c.l.b16 %v2303
    %v2489 = vunpack.c.h.b16 %v2303
    %v2490 = vunpack.c.l.b16 %v2304
    %v2491 = vunpack.c.h.b16 %v2304
    %v2492 = vunpack.c.l.b16 %v2305
    %v2493 = vunpack.c.h.b16 %v2305
    %v2494 = vunpack.c.l.b16 %v2306
    %v2495 = vunpack.c.h.b16 %v2306
    %v2496 = vunpack.c.l.b16 %v2307
    %v2497 = vunpack.c.h.b16 %v2307
    %v2498 = vunpack.c.l.b16 %v2308
    %v2499 = vunpack.c.h.b16 %v2308
    %v2500 = vunpack.c.l.b16 %v2309
    %v2501 = vunpack.c.h.b16 %v2309
    %v2502 = vpack.c.b16 %v2376, %v2374
    %v2503 = vpack.c.b16 %v2377, %v2375
    %v2504 = vpack.c.b16 %v2380, %v2378
    %v2505 = vpack.c.b16 %v2381, %v2379
    %v2506 = vpack.c.b16 %v2384, %v2382
    %v2507 = vpack.c.b16 %v2385, %v2383
    %v2508 = vpack.c.b16 %v2388, %v2386
    %v2509 = vpack.c.b16 %v2389, %v2387
    %v2510 = vpack.c.b16 %v2392, %v2390
    %v2511 = vpack.c.b16 %v2393, %v2391
    %v2512 = vpack.c.b16 %v2396, %v2394
    %v2513 = vpack.c.b16 %v2397, %v2395
    %v2514 = vpack.c.b16 %v2400, %v2398
    %v2515 = vpack.c.b16 %v2401, %v2399
    %v2516 = vpack.c.b16 %v2404, %v2402
    %v2517 = vpack.c.b16 %v2405, %v2403
    %v2518 = vpack.c.b16 %v2408, %v2406
    %v2519 = vpack.c.b16 %v2409, %v2407
    %v2520 = vpack.c.b16 %v2412, %v2410
    %v2521 = vpack.c.b16 %v2413, %v2411
    %v2522 = vpack.c.b16 %v2416, %v2414
    %v2523 = vpack.c.b16 %v2417, %v2415
    %v2524 = vpack.c.b16 %v2420, %v2418
    %v2525 = vpack.c.b16 %v2421, %v2419
    %v2526 = vpack.c.b16 %v2424, %v2422
    %v2527 = vpack.c.b16 %v2425, %v2423
    %v2528 = vpack.c.b16 %v2428, %v2426
    %v2529 = vpack.c.b16 %v2429, %v2427
    %v2530 = vpack.c.b16 %v2432, %v2430
    %v2531 = vpack.c.b16 %v2433, %v2431
    %v2532 = vpack.c.b16 %v2436, %v2434
    %v2533 = vpack.c.b16 %v2437, %v2435
    %v2534 = vpack.c.b16 %v2440, %v2438
    %v2535 = vpack.c.b16 %v2441, %v2439
    %v2536 = vpack.c.b16 %v2444, %v2442
    %v2537 = vpack.c.b16 %v2445, %v2443
    %v2538 = vpack.c.b16 %v2448, %v2446
    %v2539 = vpack.c.b16 %v2449, %v2447
    %v2540 = vpack.c.b16 %v2452, %v2450
    %v2541 = vpack.c.b16 %v2453, %v2451
    %v2542 = vpack.c.b16 %v2456, %v2454
    %v2543 = vpack.c.b16 %v2457, %v2455
    %v2544 = vpack.c.b16 %v2460, %v2458
    %v2545 = vpack.c.b16 %v2461, %v2459
    %v2546 = vpack.c.b16 %v2464, %v2462
    %v2547 = vpack.c.b16 %v2465, %v2463
    %v2548 = vpack.c.b16 %v2468, %v2466
    %v2549 = vpack.c.b16 %v2469, %v2467
    %v2550 = vpack.c.b16 %v2472, %v2470
    %v2551 = vpack.c.b16 %v2473, %v2471
    %v2552 = vpack.c.b16 %v2476, %v2474
    %v2553 = vpack.c.b16 %v2477, %v2475
    %v2554 = vpack.c.b16 %v2480, %v2478
    %v2555 = vpack.c.b16 %v2481, %v2479
    %v2556 = vpack.c.b16 %v2484, %v2482
    %v2557 = vpack.c.b16 %v2485, %v2483
    %v2558 = vpack.c.b16 %v2488, %v2486
    %v2559 = vpack.c.b16 %v2489, %v2487
    %v2560 = vpack.c.b16 %v2492, %v2490
    %v2561 = vpack.c.b16 %v2493, %v2491
    %v2562 = vpack.c.b16 %v2496, %v2494
    %v2563 = vpack.c.b16 %v2497, %v2495
    %v2564 = vpack.c.b16 %v2500, %v2498
    %v2565 = vpack.c.b16 %v2501, %v2499
    %2630 = vmatpush.bf16.msra.mxu0 %v2516
    %2631 = vmatpush.bf16.msra.mxu0 %v2514
    %2632 = vmatpush.bf16.msra.mxu0 %v2512
    %2633 = vmatpush.bf16.msra.mxu0 %v2510
    %2634 = vmatpush.bf16.msra.mxu0 %v2508
    %2635 = vmatpush.bf16.msra.mxu0 %v2506
    %2636 = vmatpush.bf16.msra.mxu0 %v2504
    %2637 = vmatpush.bf16.msra.mxu0 %v2502
    %2638 = vmatmul.bf16.gmra.mxu0 %v2242
    %v2639 = vpop.f32.mrf.mxu0
    %v2640 = vadd.f32 0.0, %v2639
    %v2641 = vpop.f32.mrf.mxu0
    %2642 = vdwg.mxu0
    %2643 = vmatpush.bf16.msra.mxu0 %v2532
    %2644 = vmatpush.bf16.msra.mxu0 %v2530
    %2645 = vmatpush.bf16.msra.mxu0 %v2528
    %2646 = vmatpush.bf16.msra.mxu0 %v2526
    %2647 = vmatpush.bf16.msra.mxu0 %v2524
    %2648 = vmatpush.bf16.msra.mxu0 %v2522
    %2649 = vmatpush.bf16.msra.mxu0 %v2520
    %2650 = vmatpush.bf16.msra.mxu0 %v2518
    %2651 = vmatmul.bf16.gmra.mxu0 %v2243
    %v2652 = vpop.f32.mrf.mxu0
    %v2653 = vadd.f32 %v2640, %v2652
    %v2654 = vpop.f32.mrf.mxu0
    %2655 = vdwg.mxu0
    %2656 = vmatpush.bf16.msra.mxu0 %v2548
    %2657 = vmatpush.bf16.msra.mxu0 %v2546
    %2658 = vmatpush.bf16.msra.mxu0 %v2544
    %2659 = vmatpush.bf16.msra.mxu0 %v2542
    %2660 = vmatpush.bf16.msra.mxu0 %v2540
    %2661 = vmatpush.bf16.msra.mxu0 %v2538
    %2662 = vmatpush.bf16.msra.mxu0 %v2536
    %2663 = vmatpush.bf16.msra.mxu0 %v2534
    %2664 = vmatmul.bf16.gmra.mxu0 %v2244
    %v2665 = vpop.f32.mrf.mxu0
    %v2666 = vadd.f32 %v2653, %v2665
    %v2667 = vpop.f32.mrf.mxu0
    %2668 = vdwg.mxu0
    %2669 = vmatpush.bf16.msra.mxu0 %v2564
    %2670 = vmatpush.bf16.msra.mxu0 %v2562
    %2671 = vmatpush.bf16.msra.mxu0 %v2560
    %2672 = vmatpush.bf16.msra.mxu0 %v2558
    %2673 = vmatpush.bf16.msra.mxu0 %v2556
    %2674 = vmatpush.bf16.msra.mxu0 %v2554
    %2675 = vmatpush.bf16.msra.mxu0 %v2552
    %2676 = vmatpush.bf16.msra.mxu0 %v2550
    %2677 = vmatmul.bf16.gmra.mxu0 %v2245
    %v2678 = vpop.f32.mrf.mxu0
    %v2679 = vadd.f32 %v2666, %v2678
    %v2680 = vpop.f32.mrf.mxu0
    %2681 = vdwg.mxu0
    %2682 = vmatpush.bf16.msra.mxu0 %v2517
    %2683 = vmatpush.bf16.msra.mxu0 %v2515
    %2684 = vmatpush.bf16.msra.mxu0 %v2513
    %2685 = vmatpush.bf16.msra.mxu0 %v2511
    %2686 = vmatpush.bf16.msra.mxu0 %v2509
    %2687 = vmatpush.bf16.msra.mxu0 %v2507
    %2688 = vmatpush.bf16.msra.mxu0 %v2505
    %2689 = vmatpush.bf16.msra.mxu0 %v2503
    %2690 = vmatmul.bf16.gmra.mxu0 %v2242
    %v2691 = vpop.f32.mrf.mxu0
    %v2692 = vadd.f32 0.0, %v2691
    %v2693 = vpop.f32.mrf.mxu0
    %2694 = vdwg.mxu0
    %2695 = vmatpush.bf16.msra.mxu0 %v2533
    %2696 = vmatpush.bf16.msra.mxu0 %v2531
    %2697 = vmatpush.bf16.msra.mxu0 %v2529
    %2698 = vmatpush.bf16.msra.mxu0 %v2527
    %2699 = vmatpush.bf16.msra.mxu0 %v2525
    %2700 = vmatpush.bf16.msra.mxu0 %v2523
    %2701 = vmatpush.bf16.msra.mxu0 %v2521
    %2702 = vmatpush.bf16.msra.mxu0 %v2519
    %2703 = vmatmul.bf16.gmra.mxu0 %v2243
    %v2704 = vpop.f32.mrf.mxu0
    %v2705 = vadd.f32 %v2692, %v2704
    %v2706 = vpop.f32.mrf.mxu0
    %2707 = vdwg.mxu0
    %2708 = vmatpush.bf16.msra.mxu0 %v2549
    %2709 = vmatpush.bf16.msra.mxu0 %v2547
    %2710 = vmatpush.bf16.msra.mxu0 %v2545
    %2711 = vmatpush.bf16.msra.mxu0 %v2543
    %2712 = vmatpush.bf16.msra.mxu0 %v2541
    %2713 = vmatpush.bf16.msra.mxu0 %v2539
    %2714 = vmatpush.bf16.msra.mxu0 %v2537
    %2715 = vmatpush.bf16.msra.mxu0 %v2535
    %2716 = vmatmul.bf16.gmra.mxu0 %v2244
    %v2717 = vpop.f32.mrf.mxu0
    %v2718 = vadd.f32 %v2705, %v2717
    %v2719 = vpop.f32.mrf.mxu0
    %2720 = vdwg.mxu0
    %2721 = vmatpush.bf16.msra.mxu0 %v2565
    %2722 = vmatpush.bf16.msra.mxu0 %v2563
    %2723 = vmatpush.bf16.msra.mxu0 %v2561
    %2724 = vmatpush.bf16.msra.mxu0 %v2559
    %2725 = vmatpush.bf16.msra.mxu0 %v2557
    %2726 = vmatpush.bf16.msra.mxu0 %v2555
    %2727 = vmatpush.bf16.msra.mxu0 %v2553
    %2728 = vmatpush.bf16.msra.mxu0 %v2551
    %2729 = vmatmul.bf16.gmra.mxu0 %v2245
    %v2730 = vpop.f32.mrf.mxu0
    %v2731 = vadd.f32 %v2718, %v2730
    %v2732 = vpop.f32.mrf.mxu0
    %2733 = vdwg.mxu0
    %v2734 = vld [vmem:[%s5] sm:$0x3]
    %v2735 = vld [vmem:[%s6] sm:$0x3]
    %vm2736 = vcmask 523264
    %v2737 = vsel %vm2736, %v2679, 0.0
    %2738 = vadd.xlane.f32.xlu0 %v2737
    %v2739 = vpop.xlane.xlu0 %2738
    %v2740 = vmul.f32 %v2739, 0.015625
    %v2741 = vsub.f32 %v2679, %v2740
    %v2742 = vmul.f32 %v2741, %v2741
    %v2743 = vsel %vm2736, %v2742, 0.0
    %2744 = vadd.xlane.f32.xlu0 %v2743
    %v2745 = vpop.xlane.xlu0 %2744
    %v2746 = vmul.f32 %v2745, 0.015625
    %v2747 = vmax.f32 %v2746, 0.0
    %v2748 = vadd.f32 %v2747, 1e-05
    %v2749 = vrsqrt.pop %v2748
    %v2750 = vmul.f32 %v2749, %v2748
    %v2751 = vmul.f32 %v2750, %v2749
    %v2752 = vmul.f32 0.5, %v2751
    %v2753 = vsub.f32 1.5, %v2752
    %v2754 = vmul.f32 %v2749, %v2753
    %vm2755 = vweird.f32 %v2748
    %vm2756 = vweird.f32 %v2749
    %vm2757 = vmor %vm2755, %vm2756
    %v2758 = vsel %vm2757, %v2749, %v2754
    %v2759 = vmul.f32 %v2741, %v2758
    %2761 = vrot.lane.b32.xlu0 %v2679, 64
    %v2762 = vpop.permute.xlu0 %2761
    %v2764 = vsel %vm2736, %v2762, 0.0
    %2765 = vadd.xlane.f32.xlu0 %v2764
    %v2766 = vpop.xlane.xlu0 %2765
    %v2767 = vmul.f32 %v2766, 0.015625
    %v2768 = vsub.f32 %v2679, %v2767
    %v2769 = vmul.f32 %v2768, %v2768
    %2771 = vrot.lane.b32.xlu0 %v2769, 64
    %v2772 = vpop.permute.xlu0 %2771
    %v2774 = vsel %vm2736, %v2772, 0.0
    %2775 = vadd.xlane.f32.xlu0 %v2774
    %v2776 = vpop.xlane.xlu0 %2775
    %v2777 = vmul.f32 %v2776, 0.015625
    %v2778 = vmax.f32 %v2777, 0.0
    %v2779 = vadd.f32 %v2778, 1e-05
    %v2780 = vrsqrt.pop %v2779
    %v2781 = vmul.f32 %v2780, %v2779
    %v2782 = vmul.f32 %v2781, %v2780
    %v2783 = vmul.f32 0.5, %v2782
    %v2784 = vsub.f32 1.5, %v2783
    %v2785 = vmul.f32 %v2780, %v2784
    %vm2786 = vweird.f32 %v2779
    %vm2787 = vweird.f32 %v2780
    %vm2788 = vmor %vm2786, %vm2787
    %v2789 = vsel %vm2788, %v2780, %v2785
    %v2790 = vmul.f32 %v2768, %v2789
    %v2791 = vsel %vm2736, %v2731, 0.0
    %2792 = vadd.xlane.f32.xlu0 %v2791
    %v2793 = vpop.xlane.xlu0 %2792
    %v2794 = vmul.f32 %v2793, 0.015625
    %v2795 = vsub.f32 %v2731, %v2794
    %v2796 = vmul.f32 %v2795, %v2795
    %v2797 = vsel %vm2736, %v2796, 0.0
    %2798 = vadd.xlane.f32.xlu0 %v2797
    %v2799 = vpop.xlane.xlu0 %2798
    %v2800 = vmul.f32 %v2799, 0.015625
    %v2801 = vmax.f32 %v2800, 0.0
    %v2802 = vadd.f32 %v2801, 1e-05
    %v2803 = vrsqrt.pop %v2802
    %v2804 = vmul.f32 %v2803, %v2802
    %v2805 = vmul.f32 %v2804, %v2803
    %v2806 = vmul.f32 0.5, %v2805
    %v2807 = vsub.f32 1.5, %v2806
    %v2808 = vmul.f32 %v2803, %v2807
    %vm2809 = vweird.f32 %v2802
    %vm2810 = vweird.f32 %v2803
    %vm2811 = vmor %vm2809, %vm2810
    %v2812 = vsel %vm2811, %v2803, %v2808
    %v2813 = vmul.f32 %v2795, %v2812
    %2815 = vrot.lane.b32.xlu0 %v2731, 64
    %v2816 = vpop.permute.xlu0 %2815
    %v2818 = vsel %vm2736, %v2816, 0.0
    %2819 = vadd.xlane.f32.xlu0 %v2818
    %v2820 = vpop.xlane.xlu0 %2819
    %v2821 = vmul.f32 %v2820, 0.015625
    %v2822 = vsub.f32 %v2731, %v2821
    %v2823 = vmul.f32 %v2822, %v2822
    %2825 = vrot.lane.b32.xlu0 %v2823, 64
    %v2826 = vpop.permute.xlu0 %2825
    %v2828 = vsel %vm2736, %v2826, 0.0
    %2829 = vadd.xlane.f32.xlu0 %v2828
    %v2830 = vpop.xlane.xlu0 %2829
    %v2831 = vmul.f32 %v2830, 0.015625
    %v2832 = vmax.f32 %v2831, 0.0
    %v2833 = vadd.f32 %v2832, 1e-05
    %v2834 = vrsqrt.pop %v2833
    %v2835 = vmul.f32 %v2834, %v2833
    %v2836 = vmul.f32 %v2835, %v2834
    %v2837 = vmul.f32 0.5, %v2836
    %v2838 = vsub.f32 1.5, %v2837
    %v2839 = vmul.f32 %v2834, %v2838
    %vm2840 = vweird.f32 %v2833
    %vm2841 = vweird.f32 %v2834
    %vm2842 = vmor %vm2840, %vm2841
    %v2843 = vsel %vm2842, %v2834, %v2839
    %v2844 = vmul.f32 %v2822, %v2843
    %v2845 = vsel %vm2736, %v2759, %v2790
    %v2846 = vsel %vm2736, %v2813, %v2844
    %v2848 = vperm.slane %v2734, 0
    %v2849 = vperm.slane %v2734, 1
    %v2852 = vmul.f32 %v2845, %v2848
    %v2853 = vmul.f32 %v2846, %v2849
    %v2855 = vperm.slane %v2735, 0
    %v2856 = vperm.slane %v2735, 1
    %v2859 = vadd.f32 %v2852, %v2855
    %v2860 = vadd.f32 %v2853, %v2856
    %v2861 = vmax.f32 %v2859, 0.0
    %v2862 = vmax.f32 %v2860, 0.0
    %v2863 = vpack.c.bf16 %v2861, %v2861
    %v2864 = vpack.c.bf16 %v2862, %v2862
    %v2865 = vld [vmem:[#allocation11] sm:$0xf]
    %v2866 = vld [vmem:[#allocation11 + $0x4] sm:$0xf]
    %v2867 = vld [vmem:[#allocation11 + $0x8] sm:$0xf]
    %v2868 = vld [vmem:[#allocation11 + $0xc] sm:$0xf]
    %v2869 = vld [vmem:[#allocation11 + $0x10] sm:$0xf]
    %v2870 = vld [vmem:[#allocation11 + $0x14] sm:$0xf]
    %v2871 = vld [vmem:[#allocation11 + $0x18] sm:$0xf]
    %v2872 = vld [vmem:[#allocation11 + $0x1c] sm:$0xf]
    %v2873 = vld [vmem:[#allocation11 + $0x20] sm:$0xf]
    %v2874 = vld [vmem:[#allocation11 + $0x24] sm:$0xf]
    %v2875 = vld [vmem:[#allocation11 + $0x28] sm:$0xf]
    %v2876 = vld [vmem:[#allocation11 + $0x2c] sm:$0xf]
    %v2877 = vld [vmem:[#allocation11 + $0x30] sm:$0xf]
    %v2878 = vld [vmem:[#allocation11 + $0x34] sm:$0xf]
    %v2879 = vld [vmem:[#allocation11 + $0x38] sm:$0xf]
    %v2880 = vld [vmem:[#allocation11 + $0x3c] sm:$0xf]
    %v2881 = vld [vmem:[#allocation11 + $0x40] sm:$0xf]
    %v2882 = vld [vmem:[#allocation11 + $0x44] sm:$0xf]
    %v2883 = vld [vmem:[#allocation11 + $0x48] sm:$0xf]
    %v2884 = vld [vmem:[#allocation11 + $0x4c] sm:$0xf]
    %v2885 = vld [vmem:[#allocation11 + $0x50] sm:$0xf]
    %v2886 = vld [vmem:[#allocation11 + $0x54] sm:$0xf]
    %v2887 = vld [vmem:[#allocation11 + $0x58] sm:$0xf]
    %v2888 = vld [vmem:[#allocation11 + $0x5c] sm:$0xf]
    %v2889 = vld [vmem:[#allocation11 + $0x60] sm:$0xf]
    %v2890 = vld [vmem:[#allocation11 + $0x64] sm:$0xf]
    %v2891 = vld [vmem:[#allocation11 + $0x68] sm:$0xf]
    %v2892 = vld [vmem:[#allocation11 + $0x6c] sm:$0xf]
    %v2893 = vld [vmem:[#allocation11 + $0x70] sm:$0xf]
    %v2894 = vld [vmem:[#allocation11 + $0x74] sm:$0xf]
    %v2895 = vld [vmem:[#allocation11 + $0x78] sm:$0xf]
    %v2896 = vld [vmem:[#allocation11 + $0x7c] sm:$0xf]
    %v2897 = vld [vmem:[%s8] sm:$0x1]
    %v2899 = vperm.slane %v2897, 0
    %v2933 = vunpack.c.l.b16 %v2865
    %v2934 = vunpack.c.l.b16 %v2866
    %v2935 = vunpack.c.l.b16 %v2867
    %v2936 = vunpack.c.l.b16 %v2868
    %v2937 = vunpack.c.l.b16 %v2869
    %v2938 = vunpack.c.l.b16 %v2870
    %v2939 = vunpack.c.l.b16 %v2871
    %v2940 = vunpack.c.l.b16 %v2872
    %v2941 = vunpack.c.l.b16 %v2873
    %v2942 = vunpack.c.l.b16 %v2874
    %v2943 = vunpack.c.l.b16 %v2875
    %v2944 = vunpack.c.l.b16 %v2876
    %v2945 = vunpack.c.l.b16 %v2877
    %v2946 = vunpack.c.l.b16 %v2878
    %v2947 = vunpack.c.l.b16 %v2879
    %v2948 = vunpack.c.l.b16 %v2880
    %v2949 = vunpack.c.l.b16 %v2881
    %v2950 = vunpack.c.l.b16 %v2882
    %v2951 = vunpack.c.l.b16 %v2883
    %v2952 = vunpack.c.l.b16 %v2884
    %v2953 = vunpack.c.l.b16 %v2885
    %v2954 = vunpack.c.l.b16 %v2886
    %v2955 = vunpack.c.l.b16 %v2887
    %v2956 = vunpack.c.l.b16 %v2888
    %v2957 = vunpack.c.l.b16 %v2889
    %v2958 = vunpack.c.l.b16 %v2890
    %v2959 = vunpack.c.l.b16 %v2891
    %v2960 = vunpack.c.l.b16 %v2892
    %v2961 = vunpack.c.l.b16 %v2893
    %v2962 = vunpack.c.l.b16 %v2894
    %v2963 = vunpack.c.l.b16 %v2895
    %v2964 = vunpack.c.l.b16 %v2896
    %v2965 = vpack.c.b16 %v2934, %v2933
    %v2966 = vpack.c.b16 %v2936, %v2935
    %v2967 = vpack.c.b16 %v2938, %v2937
    %v2968 = vpack.c.b16 %v2940, %v2939
    %v2969 = vpack.c.b16 %v2942, %v2941
    %v2970 = vpack.c.b16 %v2944, %v2943
    %v2971 = vpack.c.b16 %v2946, %v2945
    %v2972 = vpack.c.b16 %v2948, %v2947
    %v2973 = vpack.c.b16 %v2950, %v2949
    %v2974 = vpack.c.b16 %v2952, %v2951
    %v2975 = vpack.c.b16 %v2954, %v2953
    %v2976 = vpack.c.b16 %v2956, %v2955
    %v2977 = vpack.c.b16 %v2958, %v2957
    %v2978 = vpack.c.b16 %v2960, %v2959
    %v2979 = vpack.c.b16 %v2962, %v2961
    %v2980 = vpack.c.b16 %v2964, %v2963
    %2997 = vmatpush.bf16.msra.mxu0 %v2972
    %2998 = vmatpush.bf16.msra.mxu0 %v2971
    %2999 = vmatpush.bf16.msra.mxu0 %v2970
    %3000 = vmatpush.bf16.msra.mxu0 %v2969
    %3001 = vmatpush.bf16.msra.mxu0 %v2968
    %3002 = vmatpush.bf16.msra.mxu0 %v2967
    %3003 = vmatpush.bf16.msra.mxu0 %v2966
    %3004 = vmatpush.bf16.msra.mxu0 %v2965
    %3005 = vmatmul.bf16.gmra.mxu0 %v2863
    %v3006 = vpop.f32.mrf.mxu0
    %v3007 = vadd.f32 %v2899, %v3006
    %v3008 = vpop.f32.mrf.mxu0
    %3009 = vdwg.mxu0
    %3010 = vmatpush.bf16.msra.mxu0 %v2980
    %3011 = vmatpush.bf16.msra.mxu0 %v2979
    %3012 = vmatpush.bf16.msra.mxu0 %v2978
    %3013 = vmatpush.bf16.msra.mxu0 %v2977
    %3014 = vmatpush.bf16.msra.mxu0 %v2976
    %3015 = vmatpush.bf16.msra.mxu0 %v2975
    %3016 = vmatpush.bf16.msra.mxu0 %v2974
    %3017 = vmatpush.bf16.msra.mxu0 %v2973
    %3018 = vmatmul.bf16.gmra.mxu0 %v2864
    %v3019 = vpop.f32.mrf.mxu0
    %v3020 = vadd.f32 %v3007, %v3019
    %v3021 = vpop.f32.mrf.mxu0
    %3022 = vdwg.mxu0
    %v3023 = vmax.f32 %v3020, 0.0
    %v3024 = vpack.c.bf16 %v3023, %v3023
    %v3025 = vld [vmem:[#allocation13] sm:$0xf]
    %v3026 = vld [vmem:[#allocation13 + $0x4] sm:$0xf]
    %v3027 = vld [vmem:[#allocation13 + $0x8] sm:$0xf]
    %v3028 = vld [vmem:[#allocation13 + $0xc] sm:$0xf]
    %v3029 = vld [vmem:[#allocation13 + $0x10] sm:$0xf]
    %v3030 = vld [vmem:[#allocation13 + $0x14] sm:$0xf]
    %v3031 = vld [vmem:[#allocation13 + $0x18] sm:$0xf]
    %v3032 = vld [vmem:[#allocation13 + $0x1c] sm:$0xf]
    %v3033 = vld [vmem:[#allocation13 + $0x20] sm:$0xf]
    %v3034 = vld [vmem:[#allocation13 + $0x24] sm:$0xf]
    %v3035 = vld [vmem:[#allocation13 + $0x28] sm:$0xf]
    %v3036 = vld [vmem:[#allocation13 + $0x2c] sm:$0xf]
    %v3037 = vld [vmem:[#allocation13 + $0x30] sm:$0xf]
    %v3038 = vld [vmem:[#allocation13 + $0x34] sm:$0xf]
    %v3039 = vld [vmem:[#allocation13 + $0x38] sm:$0xf]
    %v3040 = vld [vmem:[#allocation13 + $0x3c] sm:$0xf]
    %v3041 = vld [vmem:[%s10] sm:$0x1]
    %v3043 = vperm.slane %v3041, 0
    %v3061 = vunpack.c.l.b16 %v3025
    %v3062 = vunpack.c.l.b16 %v3026
    %v3063 = vunpack.c.l.b16 %v3027
    %v3064 = vunpack.c.l.b16 %v3028
    %v3065 = vunpack.c.l.b16 %v3029
    %v3066 = vunpack.c.l.b16 %v3030
    %v3067 = vunpack.c.l.b16 %v3031
    %v3068 = vunpack.c.l.b16 %v3032
    %v3069 = vunpack.c.l.b16 %v3033
    %v3070 = vunpack.c.l.b16 %v3034
    %v3071 = vunpack.c.l.b16 %v3035
    %v3072 = vunpack.c.l.b16 %v3036
    %v3073 = vunpack.c.l.b16 %v3037
    %v3074 = vunpack.c.l.b16 %v3038
    %v3075 = vunpack.c.l.b16 %v3039
    %v3076 = vunpack.c.l.b16 %v3040
    %v3077 = vpack.c.b16 %v3062, %v3061
    %v3078 = vpack.c.b16 %v3064, %v3063
    %v3079 = vpack.c.b16 %v3066, %v3065
    %v3080 = vpack.c.b16 %v3068, %v3067
    %v3081 = vpack.c.b16 %v3070, %v3069
    %v3082 = vpack.c.b16 %v3072, %v3071
    %v3083 = vpack.c.b16 %v3074, %v3073
    %v3084 = vpack.c.b16 %v3076, %v3075
    %3093 = vmatpush.bf16.msra.mxu0 %v3084
    %3094 = vmatpush.bf16.msra.mxu0 %v3083
    %3095 = vmatpush.bf16.msra.mxu0 %v3082
    %3096 = vmatpush.bf16.msra.mxu0 %v3081
    %3097 = vmatpush.bf16.msra.mxu0 %v3080
    %3098 = vmatpush.bf16.msra.mxu0 %v3079
    %3099 = vmatpush.bf16.msra.mxu0 %v3078
    %3100 = vmatpush.bf16.msra.mxu0 %v3077
    %3101 = vmatmul.bf16.gmra.mxu0 %v3024
    %v3102 = vpop.f32.mrf.mxu0
    %v3103 = vadd.f32 %v3043, %v3102
    %v3104 = vpop.f32.mrf.mxu0
    %3105 = vdwg.mxu0
    %3106 = vst [vmem:[#allocation14] sm:$0xff] %v3103
    // Predicated region
    $region74: #{tpu_custom_call.1} parent=1 // pred_check
      _
    $region75: #{tpu_custom_call.1} parent=1 // pred_check_branch
      %3108 = sbr.rel (0) target = $region77
    $region76: #{tpu_custom_call.1} parent=1 // pred_region
      %3110 = vsyncadd [#allocation4], 0
      %s3112 = sshll.u32 [#allocation14], 4
      %s3113 = int_to_ptr.vmem [resolvable:$true] %s3112
      %s3114 = sshll.u32 %s11, 4
      %s3115 = int_to_ptr.hbm [resolvable:$true] %s3114
      %3117 = dma.vmem_to_hbm [thread:$0]  %s3113, 128, %s3115, [#allocation4]
    $region77: #{tpu_custom_call.1} parent=1 // pred_fallthru
      _
    // Predicated region
    $region78: #{tpu_custom_call.1} parent=1 // pred_check
      _
    $region79: #{tpu_custom_call.1} parent=1 // pred_check_branch
      %3119 = sbr.rel (0) target = $region81
    $region80: #{tpu_custom_call.1} parent=1 // pred_region
      %3121 = dma.done [#allocation4], 128
    $region81: #{tpu_custom_call.1} parent=1 // pred_fallthru
      _
    %3122 = vsyncpa [#allocation3], 1
    %3123 = vsyncpa [#allocation6], 1
    %3124 = vsyncpa [#allocation9], 1
    %3125 = vsyncpa [#allocation12], 1
    %3126 = vsyncpa [#allocation4], 1

</llo_original>
